<compile_context>
chip_gen: v6e
topology: v6e:2x2x1
jax: 0.10.0
libtpu: 0.0.40
codegen_flags: <defaults>
</compile_context>

<pallas_src>
import math

import jax
import jax.numpy as jnp
from jax.experimental import pallas as pl
from jax.experimental.pallas import tpu as pltpu

K = 8                 # conv kernel size == stride (non-overlapping patches)
F = 16                # conv output channels
HID = 64              # feature dim of z
HID_PAD = 128         # zero-padded feature dim (full MXU lane use; exact)
NUM_CLASSES = 10
HEAD_PAD = 128        # merged head lanes: [10 label | 1 domain | 117 zero pad]
LANE = 128            # vreg lane width
GROUP = LANE // K     # 16 patches packed per lane-dense input row


def dann_kernel(x_ref, wconv_ref, bconv_ref, wfc_ref, bfc_ref,
                whead_ref, bhead_ref, out_ref):
    TB = out_ref.shape[0]

    # ---- feature extractor ----
    # Conv1d(1,F,k=8,s=8): one lane-dense matmul of packed patch rows against
    # the block-diagonal (128, 16*F) weight.  Output lane g*F+f = channel f of
    # patch g within the row (patch-major channel layout).
    conv = jnp.dot(x_ref[...], wconv_ref[...],
                   preferred_element_type=jnp.float32)           # (TB*RPS, 256)
    conv = jnp.maximum(conv + bconv_ref[...], 0.0)

    # Row-major (TB*RPS, 16*F) -> (TB, P*F); element order p*F+f matches the
    # pre-permuted w_fc (PyTorch's channel-major flatten folded in at init).
    feats = conv.reshape(TB, -1)

    z = jnp.dot(feats.astype(jnp.bfloat16), wfc_ref[...],
                preferred_element_type=jnp.float32) + bfc_ref[...]  # (TB, HID_PAD)
    z = jnp.maximum(z, 0.0)          # pad cols are exactly 0 (zero weight/bias)

    # ---- merged label + domain heads (one lane-dense (TB,128) matmul) ----
    # grad_reverse(z) is the identity in the forward pass.
    # TODO(synk): wrap z with jax.custom_vjp (negated gradient) before any
    # training use — differentiating this fused call will NOT negate the grad.
    h = jnp.dot(z.astype(jnp.bfloat16), whead_ref[...],
                preferred_element_type=jnp.float32) + bhead_ref[...]  # (TB, 128)

    col = jax.lax.broadcasted_iota(jnp.int32, h.shape, 1)
    is_label = col < NUM_CLASSES
    is_domain = col == NUM_CLASSES

    # log_softmax over the 10 label lanes only (pad lanes -> -inf -> exp 0).
    masked = jnp.where(is_label, h, -jnp.inf)
    m = jnp.max(masked, axis=-1, keepdims=True)
    lse = m + jnp.log(jnp.sum(jnp.exp(masked - m), axis=-1, keepdims=True))
    log_probs = h - lse

    # Numerically stable sigmoid via EUP tanh, evaluated only on the domain lane.
    d_logit = h[:, NUM_CLASSES:NUM_CLASSES + 1]                  # (TB, 1)
    sig = 0.5 * (jnp.tanh(0.5 * d_logit) + 1.0)

    out_ref[...] = jnp.where(is_label, log_probs,
                             jnp.where(is_domain, sig, 0.0))


def dann_forward(x, params, *, batch_tile=8):
    w_conv_bd, b_conv_t, w_fc, b_fc, w_head, b_head = params
    B = x.shape[0]
    L = math.prod(x.shape[1:])
    assert L % LANE == 0, "signal length must pack into 128-lane rows"
    RPS = L // LANE                      # packed rows per sample (= P / 16)
    P = L // K
    assert w_fc.shape == (P * F, HID_PAD)

    TB = batch_tile if (B % batch_tile == 0) else B
    grid = (B // TB,)

    # x.view(B,1,-1) + stride==kernel im2col + 16-patch packing is one
    # contiguous reshape; bf16 cast here so the kernel's activation DMA is bf16.
    x_packed = x.reshape(B * RPS, LANE).astype(jnp.bfloat16)

    inv = lambda i: (0, 0)               # grid-invariant weight blocks

    out = pl.pallas_call(
        dann_kernel,
        out_shape=jax.ShapeDtypeStruct((B, HEAD_PAD), jnp.float32),
        grid=grid,
        in_specs=[
            pl.BlockSpec((TB * RPS, LANE), lambda i: (i, 0)),
            pl.BlockSpec((LANE, GROUP * F), inv),
            pl.BlockSpec((1, GROUP * F), inv),
            pl.BlockSpec((P * F, HID_PAD), inv),
            pl.BlockSpec((1, HID_PAD), inv),
            pl.BlockSpec((HID_PAD, HEAD_PAD), inv),
            pl.BlockSpec((1, HEAD_PAD), inv),
        ],
        out_specs=pl.BlockSpec((TB, HEAD_PAD), lambda i: (i, 0)),
        compiler_params=pltpu.CompilerParams(
            dimension_semantics=("parallel",)),
        # Resident VMEM here is ~1.3 MiB, far under every generation's limit.
        # TODO(synk): when w_fc / the batch tile grow, (a) single-buffer the
        # grid-invariant weight specs (pipeline_mode=pl.Buffered(1)), and
        # (b) tile the P*F contraction as a trailing "arbitrary" grid axis with
        # an f32 VMEM accumulator, sizing 2x-buffered bf16 tiles under v7x's
        # 64 MiB VMEM (32 MiB scoped default; 16 MiB default on v5e).
    )(x_packed, w_conv_bd, b_conv_t, w_fc, b_fc, w_head, b_head)

    label = out[:, :NUM_CLASSES]          # log-probabilities
    domain = out[:, NUM_CLASSES]          # sigmoid output
    return label, domain


def make_params(key, L):
    """PyTorch-layout f32 params + the one-time kernel relayouts."""
    P = L // K
    ks = jax.random.split(key, 8)

    def lin(k, fan_in, shape):
        return jax.random.normal(k, shape, jnp.float32) / jnp.sqrt(float(fan_in))

    # PyTorch-layout weights (reference truth).
    w_conv = lin(ks[0], K, (K, F))            # Conv1d weight (F,1,K) stored (K,F)
    b_conv = lin(ks[1], K, (1, F))
    w_fc = lin(ks[2], F * P, (F * P, HID))    # Linear(F*P, HID): row index f*P+p
    b_fc = lin(ks[3], F * P, (1, HID))
    w_lab = lin(ks[4], HID, (HID, NUM_CLASSES))
    b_lab = lin(ks[5], HID, (1, NUM_CLASSES))
    w_dom = lin(ks[6], HID, (HID, 1))
    b_dom = lin(ks[7], HID, (1, 1))
    raw = (w_conv, b_conv, w_fc, b_fc, w_lab, b_lab, w_dom, b_dom)

    # Block-diagonal conv weight: 16 identical (K,F) blocks -> (128, 16*F).
    w_conv_bd = jnp.kron(jnp.eye(GROUP, dtype=jnp.float32), w_conv)
    b_conv_t = jnp.tile(b_conv, (1, GROUP))                       # (1, 16*F)

    # Fold PyTorch's channel-major (B,F,P) flatten into w_fc (row f*P+p -> p*F+f),
    # then zero-pad HID 64 -> 128 (exact: pad cols/rows are zero).
    w_fc_perm = w_fc.reshape(F, P, HID).transpose(1, 0, 2).reshape(P * F, HID)
    w_fc_pad = jnp.zeros((P * F, HID_PAD), jnp.float32).at[:, :HID].set(w_fc_perm)
    b_fc_pad = jnp.zeros((1, HID_PAD), jnp.float32).at[:, :HID].set(b_fc)

    # Merged lane-dense head: [10 label | 1 domain | 117 zero pad].
    w_head = jnp.zeros((HID_PAD, HEAD_PAD), jnp.float32)
    w_head = w_head.at[:HID, :NUM_CLASSES].set(w_lab)
    w_head = w_head.at[:HID, NUM_CLASSES:NUM_CLASSES + 1].set(w_dom)
    b_head = jnp.zeros((1, HEAD_PAD), jnp.float32)
    b_head = b_head.at[:, :NUM_CLASSES].set(b_lab)
    b_head = b_head.at[:, NUM_CLASSES:NUM_CLASSES + 1].set(b_dom)

    # bf16 weights for the MXU (f32 accumulation in-kernel); biases stay f32.
    kernel_params = (w_conv_bd.astype(jnp.bfloat16), b_conv_t,
                     w_fc_pad.astype(jnp.bfloat16), b_fc_pad,
                     w_head.astype(jnp.bfloat16), b_head)
    return kernel_params, raw


def dann_reference(x, raw):
    """Pure-JAX forward from PyTorch-layout weights, with matching bf16 quant."""
    w_conv, b_conv, w_fc, b_fc, w_lab, b_lab, w_dom, b_dom = raw
    bf = lambda a: a.astype(jnp.bfloat16)
    B = x.shape[0]
    sig_in = x.reshape(B, -1)                               # x.view(B, 1, -1)
    P = sig_in.shape[1] // K
    patches = sig_in.reshape(B, P, K)                       # stride==kernel im2col
    conv = jnp.einsum("bpk,kf->bpf", bf(patches), bf(w_conv),
                      preferred_element_type=jnp.float32) + b_conv
    conv = jnp.maximum(conv, 0.0)                           # (B, P, F)
    feats = conv.transpose(0, 2, 1).reshape(B, F * P)       # channel-major flatten
    z = jnp.dot(bf(feats), bf(w_fc), preferred_element_type=jnp.float32) + b_fc
    z = jnp.maximum(z, 0.0)
    label = jax.nn.log_softmax(
        jnp.dot(bf(z), bf(w_lab), preferred_element_type=jnp.float32) + b_lab,
        axis=-1)
    domain = jax.nn.sigmoid(
        jnp.dot(bf(z), bf(w_dom), preferred_element_type=jnp.float32) + b_dom)[:, 0]
    return label, domain


if __name__ == "__main__":
    key = jax.random.PRNGKey(0)
    kx, kp = jax.random.split(key)

    # B=16 (multiple of 16 for bf16 sublane packing, 2 parallel grid steps of 8).
    B, C, H, W = 16, 4, 16, 16
    x = jax.random.normal(kx, (B, C, H, W), jnp.float32)
    L = C * H * W                        # 1024 -> P = 128 patches, 8 rows/sample

    params, raw = make_params(kp, L)
    label, domain = jax.jit(dann_forward)(x, params)
    jax.block_until_ready((label, domain))

    assert label.shape == (B, NUM_CLASSES)
    assert domain.shape == (B,)

    # Parity vs. pure-JAX reference built from PyTorch-layout weights with the
    # same bf16 weight/activation quantization (differences: accumulation order).
    ref_label, ref_domain = jax.jit(dann_reference)(x, raw)
    assert jnp.allclose(label, ref_label, atol=2e-3, rtol=2e-3)
    assert jnp.allclose(domain, ref_domain, atol=2e-3, rtol=2e-3)

    # Sanity: label rows are valid log-probabilities, domain is a probability.
    assert jnp.allclose(jnp.exp(label).sum(axis=-1), 1.0, atol=1e-4)
    assert bool(jnp.all(jnp.isfinite(domain)))
    assert bool(jnp.all((domain >= 0.0) & (domain <= 1.0)))
    print("KERNEL_OK")
</pallas_src>

<mosaic_0001>
module attributes {stable_mosaic.version = 11 : i64} {
  func.func @dann_kernel(%arg0: i32, %arg1: memref<64x128xbf16, #tpu.memory_space<vmem>>, %arg2: memref<128x256xbf16, #tpu.memory_space<vmem>>, %arg3: memref<1x256xf32, #tpu.memory_space<vmem>>, %arg4: memref<2048x128xbf16, #tpu.memory_space<vmem>>, %arg5: memref<1x128xf32, #tpu.memory_space<vmem>>, %arg6: memref<128x128xbf16, #tpu.memory_space<vmem>>, %arg7: memref<1x128xf32, #tpu.memory_space<vmem>>, %arg8: memref<8x128xf32, #tpu.memory_space<vmem>>) attributes {dimension_semantics = [#tpu.dimension_semantics<parallel>], iteration_bounds = array<i64: 2>, scalar_prefetch = 0 : i64, scratch_operands = 0 : i64, tpu.core_type = #tpu.core_type<tc>, window_params = [{transform_indices = @transform_0, window_bounds = array<i64: 64, 128>}, {pipeline_mode = #tpu.pipeline_mode<synchronous>, transform_indices = @transform_1, window_bounds = array<i64: 128, 256>}, {pipeline_mode = #tpu.pipeline_mode<synchronous>, transform_indices = @transform_2, window_bounds = array<i64: 1, 256>}, {pipeline_mode = #tpu.pipeline_mode<synchronous>, transform_indices = @transform_3, window_bounds = array<i64: 2048, 128>}, {pipeline_mode = #tpu.pipeline_mode<synchronous>, transform_indices = @transform_4, window_bounds = array<i64: 1, 128>}, {pipeline_mode = #tpu.pipeline_mode<synchronous>, transform_indices = @transform_5, window_bounds = array<i64: 128, 128>}, {pipeline_mode = #tpu.pipeline_mode<synchronous>, transform_indices = @transform_6, window_bounds = array<i64: 1, 128>}, {transform_indices = @transform_7, window_bounds = array<i64: 8, 128>}]} {
    %c0 = arith.constant 0 : index
    %c0_0 = arith.constant 0 : index
    %0 = vector.load %arg1[%c0, %c0_0] : memref<64x128xbf16, #tpu.memory_space<vmem>>, vector<64x128xbf16>
    %c0_1 = arith.constant 0 : index
    %c0_2 = arith.constant 0 : index
    %1 = vector.load %arg2[%c0_1, %c0_2] : memref<128x256xbf16, #tpu.memory_space<vmem>>, vector<128x256xbf16>
    %cst = arith.constant dense<0.000000e+00> : vector<64x256xf32>
    %2 = tpu.matmul %0, %1, %cst {dimension_numbers = #tpu.dot_dimension_numbers<[1], [0], [0], [1], [0, 0, 1, 1], [], []>} : vector<64x128xbf16>, vector<128x256xbf16>, vector<64x256xf32> -> vector<64x256xf32>
    %c0_3 = arith.constant 0 : index
    %c0_4 = arith.constant 0 : index
    %3 = vector.load %arg3[%c0_3, %c0_4] : memref<1x256xf32, #tpu.memory_space<vmem>>, vector<1x256xf32>
    %4 = vector.broadcast %3 : vector<1x256xf32> to vector<64x256xf32>
    %5 = arith.addf %2, %4 : vector<64x256xf32>
    %cst_5 = arith.constant 0.000000e+00 : f32
    %6 = vector.broadcast %cst_5 : f32 to vector<64x256xf32>
    %7 = arith.maximumf %5, %6 : vector<64x256xf32>
    %8 = vector.shape_cast %7 : vector<64x256xf32> to vector<8x2048xf32>
    %9 = arith.truncf %8 : vector<8x2048xf32> to vector<8x2048xbf16>
    %c0_6 = arith.constant 0 : index
    %c0_7 = arith.constant 0 : index
    %10 = vector.load %arg4[%c0_6, %c0_7] : memref<2048x128xbf16, #tpu.memory_space<vmem>>, vector<2048x128xbf16>
    %cst_8 = arith.constant dense<0.000000e+00> : vector<8x128xf32>
    %11 = tpu.matmul %9, %10, %cst_8 {dimension_numbers = #tpu.dot_dimension_numbers<[1], [0], [0], [1], [0, 0, 1, 1], [], []>} : vector<8x2048xbf16>, vector<2048x128xbf16>, vector<8x128xf32> -> vector<8x128xf32>
    %c0_9 = arith.constant 0 : index
    %c0_10 = arith.constant 0 : index
    %12 = vector.load %arg5[%c0_9, %c0_10] : memref<1x128xf32, #tpu.memory_space<vmem>>, vector<1x128xf32>
    %13 = vector.broadcast %12 : vector<1x128xf32> to vector<8x128xf32>
    %14 = arith.addf %11, %13 : vector<8x128xf32>
    %cst_11 = arith.constant 0.000000e+00 : f32
    %15 = vector.broadcast %cst_11 : f32 to vector<8x128xf32>
    %16 = arith.maximumf %14, %15 : vector<8x128xf32>
    %17 = arith.truncf %16 : vector<8x128xf32> to vector<8x128xbf16>
    %c0_12 = arith.constant 0 : index
    %c0_13 = arith.constant 0 : index
    %18 = vector.load %arg6[%c0_12, %c0_13] : memref<128x128xbf16, #tpu.memory_space<vmem>>, vector<128x128xbf16>
    %cst_14 = arith.constant dense<0.000000e+00> : vector<8x128xf32>
    %19 = tpu.matmul %17, %18, %cst_14 {dimension_numbers = #tpu.dot_dimension_numbers<[1], [0], [0], [1], [0, 0, 1, 1], [], []>} : vector<8x128xbf16>, vector<128x128xbf16>, vector<8x128xf32> -> vector<8x128xf32>
    %c0_15 = arith.constant 0 : index
    %c0_16 = arith.constant 0 : index
    %20 = vector.load %arg7[%c0_15, %c0_16] : memref<1x128xf32, #tpu.memory_space<vmem>>, vector<1x128xf32>
    %21 = vector.broadcast %20 : vector<1x128xf32> to vector<8x128xf32>
    %22 = arith.addf %19, %21 : vector<8x128xf32>
    %23 = tpu.iota {dimensions = array<i32: 1>} : vector<8x128xi32>
    %c10_i32 = arith.constant 10 : i32
    %24 = vector.broadcast %c10_i32 : i32 to vector<8x128xi32>
    %25 = arith.cmpi slt, %23, %24 : vector<8x128xi32>
    %c10_i32_17 = arith.constant 10 : i32
    %26 = vector.broadcast %c10_i32_17 : i32 to vector<8x128xi32>
    %27 = arith.cmpi eq, %23, %26 : vector<8x128xi32>
    %cst_18 = arith.constant 0xFF800000 : f32
    %28 = vector.broadcast %cst_18 : f32 to vector<8x128xf32>
    %29 = arith.select %25, %22, %28 : vector<8x128xi1>, vector<8x128xf32>
    %cst_19 = arith.constant dense<0xFF800000> : vector<8xf32>
    %30 = vector.multi_reduction <maximumf>, %29, %cst_19 [1] : vector<8x128xf32> to vector<8xf32>
    %31 = vector.shape_cast %30 : vector<8xf32> to vector<8x1xf32>
    %32 = vector.broadcast %31 : vector<8x1xf32> to vector<8x128xf32>
    %33 = arith.subf %29, %32 : vector<8x128xf32>
    %34 = math.exp %33 : vector<8x128xf32>
    %cst_20 = arith.constant dense<0.000000e+00> : vector<8xf32>
    %35 = vector.multi_reduction <add>, %34, %cst_20 [1] : vector<8x128xf32> to vector<8xf32>
    %36 = vector.shape_cast %35 : vector<8xf32> to vector<8x1xf32>
    %37 = math.log %36 : vector<8x1xf32>
    %38 = arith.addf %31, %37 : vector<8x1xf32>
    %39 = vector.broadcast %38 : vector<8x1xf32> to vector<8x128xf32>
    %40 = arith.subf %22, %39 : vector<8x128xf32>
    %41 = vector.extract_strided_slice %22 {offsets = [0, 10], sizes = [8, 1], strides = [1, 1]} : vector<8x128xf32> to vector<8x1xf32>
    %cst_21 = arith.constant 5.000000e-01 : f32
    %42 = vector.broadcast %cst_21 : f32 to vector<8x1xf32>
    %43 = arith.mulf %42, %41 : vector<8x1xf32>
    %44 = math.tanh %43 : vector<8x1xf32>
    %cst_22 = arith.constant 1.000000e+00 : f32
    %45 = vector.broadcast %cst_22 : f32 to vector<8x1xf32>
    %46 = arith.addf %44, %45 : vector<8x1xf32>
    %cst_23 = arith.constant 5.000000e-01 : f32
    %47 = vector.broadcast %cst_23 : f32 to vector<8x1xf32>
    %48 = arith.mulf %47, %46 : vector<8x1xf32>
    %cst_24 = arith.constant 0.000000e+00 : f32
    %49 = vector.shape_cast %48 : vector<8x1xf32> to vector<8x1xf32>
    %50 = vector.broadcast %49 : vector<8x1xf32> to vector<8x128xf32>
    %51 = vector.broadcast %cst_24 : f32 to vector<8x128xf32>
    %52 = arith.select %27, %50, %51 : vector<8x128xi1>, vector<8x128xf32>
    %53 = arith.select %25, %40, %52 : vector<8x128xi1>, vector<8x128xf32>
    %c0_25 = arith.constant 0 : index
    %c0_26 = arith.constant 0 : index
    %54 = vector.load %arg8[%c0_25, %c0_26] : memref<8x128xf32, #tpu.memory_space<vmem>>, vector<8x128xf32>
    tpu.vector_store %arg8[%c0_25, %c0_26], %53 {strides = array<i32>} : memref<8x128xf32, #tpu.memory_space<vmem>>, vector<8x128xf32>,
    return
  }
  func.func @transform_0(%arg0: i32) -> (i32, i32) {
    %c0_i32 = arith.constant 0 : i32
    %c0_i32_0 = arith.constant 0 : i32
    return %arg0, %c0_i32 : i32, i32
  }
  func.func @transform_1(%arg0: i32) -> (i32, i32) {
    %c0_i32 = arith.constant 0 : i32
    %c0_i32_0 = arith.constant 0 : i32
    %c0_i32_1 = arith.constant 0 : i32
    return %c0_i32, %c0_i32_0 : i32, i32
  }
  func.func @transform_2(%arg0: i32) -> (i32, i32) {
    %c0_i32 = arith.constant 0 : i32
    %c0_i32_0 = arith.constant 0 : i32
    %c0_i32_1 = arith.constant 0 : i32
    return %c0_i32, %c0_i32_0 : i32, i32
  }
  func.func @transform_3(%arg0: i32) -> (i32, i32) {
    %c0_i32 = arith.constant 0 : i32
    %c0_i32_0 = arith.constant 0 : i32
    %c0_i32_1 = arith.constant 0 : i32
    return %c0_i32, %c0_i32_0 : i32, i32
  }
  func.func @transform_4(%arg0: i32) -> (i32, i32) {
    %c0_i32 = arith.constant 0 : i32
    %c0_i32_0 = arith.constant 0 : i32
    %c0_i32_1 = arith.constant 0 : i32
    return %c0_i32, %c0_i32_0 : i32, i32
  }
  func.func @transform_5(%arg0: i32) -> (i32, i32) {
    %c0_i32 = arith.constant 0 : i32
    %c0_i32_0 = arith.constant 0 : i32
    %c0_i32_1 = arith.constant 0 : i32
    return %c0_i32, %c0_i32_0 : i32, i32
  }
  func.func @transform_6(%arg0: i32) -> (i32, i32) {
    %c0_i32 = arith.constant 0 : i32
    %c0_i32_0 = arith.constant 0 : i32
    %c0_i32_1 = arith.constant 0 : i32
    return %c0_i32, %c0_i32_0 : i32, i32
  }
  func.func @transform_7(%arg0: i32) -> (i32, i32) {
    %c0_i32 = arith.constant 0 : i32
    %c0_i32_0 = arith.constant 0 : i32
    return %arg0, %c0_i32 : i32, i32
  }
}

</mosaic_0001>

<llo_original>
// kernel: dann_forward.1
$region0: #{dann_forward.1}
  #allocation0 [shape = 'u32[]', space=smem, size = 0x4, offset = 0x4, fixed_abs, tag = 'smem constant byte address 0x4 - core index']
  #allocation1 [shape = 'u32[144,128]{1,0:T(1,128)}', space=vmem, size = 0x12000, scoped, tag = 'internal scratch']
  %s0 = inlined_call_operand.vmem [shape: bf16[128,128], index: 0, kind: input, shape index: {}]
  %s1 = inlined_call_operand.vmem [shape: bf16[128,256], index: 1, kind: input, shape index: {}]
  %s2 = inlined_call_operand.vmem [shape: f32[1,256], index: 2, kind: input, shape index: {}]
  %s3 = inlined_call_operand.vmem [shape: bf16[2048,128], index: 3, kind: input, shape index: {}]
  %s4 = inlined_call_operand.vmem [shape: f32[1,128], index: 4, kind: input, shape index: {}]
  %s5 = inlined_call_operand.vmem [shape: bf16[128,128], index: 5, kind: input, shape index: {}]
  %s6 = inlined_call_operand.vmem [shape: f32[1,128], index: 6, kind: input, shape index: {}]
  %s7 = inlined_call_operand.vmem [shape: f32[16,128], index: 7, kind: output, shape index: {}]
  %s8 = sld [smem:[#allocation0]]
  $region61: #{dann_forward.1} parent=0
    _
  %s10 = ssub.s32 1, %s8
  %s11 = scalar_select 0, %s10, %s8
  loop: start=0, step=1, limit=4
  $region2: #{dann_forward.1} parent=0 // loop_pre_header
    _
  $region3: #{dann_forward.1} parent=0 // loop_header
    %s13 = sphi 0, %s17
    %p14 = scmp.ge.s32.totalorder %s13, 4
    %s23 = sphi 0, %s25
    %s26 = sphi 0, %s23
    %s27 = sphi 0, %s26
    %s43 = sphi 0, %s27
    %s47 = sphi 0, %s47
    %s49 = sphi 0, %s47
    %s50 = sphi 0, %s49
    %s64 = sphi 0, %s50
    %s68 = sphi 0, %s68
    %s70 = sphi 0, %s68
    %s71 = sphi 0, %s70
    %s85 = sphi 0, %s71
    %s89 = sphi 0, %s89
    %s91 = sphi 0, %s89
    %s92 = sphi 0, %s91
    %s106 = sphi 0, %s92
    %s110 = sphi 0, %s110
    %s112 = sphi 0, %s110
    %s113 = sphi 0, %s112
    %s127 = sphi 0, %s113
    %s131 = sphi 0, %s131
    %s133 = sphi 0, %s131
    %s134 = sphi 0, %s133
    %s148 = sphi 0, %s134
    %s152 = sphi 0, %s152
    %s154 = sphi 0, %s152
    %s155 = sphi 0, %s154
    %s169 = sphi 0, %s155
    %s175 = sphi 0, %s177
    %s178 = sphi 0, %s175
    %s179 = sphi 0, %s178
    %s195 = sphi 0, %s179
  $region4: #{dann_forward.1} parent=0 // loop_header_branch
    %16 = sbr.rel (%p14) target = $region8
  $region5: #{dann_forward.1} parent=0 // loop_body
    %s18 = ssub.s32 %s13, 1
    %s19 = ssub.s32 %s13, 2
    %s20 = sadd.s32 %s13, 1
    %s21 = ssub.s32 %s13, %s20
    %p22 = scmp.eq.s32.totalorder %s21, 0
    %s24 = sadd.s32 %s23, 1
    %s25 = scalar_select %p22, %s23, %s24
    %p28 = pneg %p22
    %p29 = scmp.eq.s32.totalorder %s13, 1
    %p30 = por %p28, %p29
    %p31 = scmp.ne.s32.totalorder %s23, %s26
    %p32 = scmp.eq.s32.totalorder %s13, 0
    %p33 = por %p31, %p32
    %p34 = scmp.ne.s32.totalorder %s23, %s26
    %p35 = scmp.eq.s32.totalorder %s18, 1
    %p36 = por %p34, %p35
    %p37 = scmp.ne.s32.totalorder %s26, %s27
    %p38 = scmp.eq.s32.totalorder %s18, 0
    %p39 = por %p37, %p38
    %p40 = scmp.ne.s32.totalorder %s26, %s27
    %p41 = scmp.eq.s32.totalorder %s19, 1
    %p42 = por %p40, %p41
    %p44 = scmp.ne.s32.totalorder %s27, %s43
    %p45 = scmp.eq.s32.totalorder %s19, 0
    %p46 = por %p44, %p45
    %s48 = sadd.s32 %s47, 1
    %p51 = scmp.eq.s32.totalorder %s13, 1
    %p52 = scmp.ne.s32.totalorder %s47, %s49
    %p53 = scmp.eq.s32.totalorder %s13, 0
    %p54 = por %p52, %p53
    %p55 = scmp.ne.s32.totalorder %s47, %s49
    %p56 = scmp.eq.s32.totalorder %s18, 1
    %p57 = por %p55, %p56
    %p58 = scmp.ne.s32.totalorder %s49, %s50
    %p59 = scmp.eq.s32.totalorder %s18, 0
    %p60 = por %p58, %p59
    %p61 = scmp.ne.s32.totalorder %s49, %s50
    %p62 = scmp.eq.s32.totalorder %s19, 1
    %p63 = por %p61, %p62
    %p65 = scmp.ne.s32.totalorder %s50, %s64
    %p66 = scmp.eq.s32.totalorder %s19, 0
    %p67 = por %p65, %p66
    %s69 = sadd.s32 %s68, 1
    %p72 = scmp.eq.s32.totalorder %s13, 1
    %p73 = scmp.ne.s32.totalorder %s68, %s70
    %p74 = scmp.eq.s32.totalorder %s13, 0
    %p75 = por %p73, %p74
    %p76 = scmp.ne.s32.totalorder %s68, %s70
    %p77 = scmp.eq.s32.totalorder %s18, 1
    %p78 = por %p76, %p77
    %p79 = scmp.ne.s32.totalorder %s70, %s71
    %p80 = scmp.eq.s32.totalorder %s18, 0
    %p81 = por %p79, %p80
    %p82 = scmp.ne.s32.totalorder %s70, %s71
    %p83 = scmp.eq.s32.totalorder %s19, 1
    %p84 = por %p82, %p83
    %p86 = scmp.ne.s32.totalorder %s71, %s85
    %p87 = scmp.eq.s32.totalorder %s19, 0
    %p88 = por %p86, %p87
    %s90 = sadd.s32 %s89, 1
    %p93 = scmp.eq.s32.totalorder %s13, 1
    %p94 = scmp.ne.s32.totalorder %s89, %s91
    %p95 = scmp.eq.s32.totalorder %s13, 0
    %p96 = por %p94, %p95
    %p97 = scmp.ne.s32.totalorder %s89, %s91
    %p98 = scmp.eq.s32.totalorder %s18, 1
    %p99 = por %p97, %p98
    %p100 = scmp.ne.s32.totalorder %s91, %s92
    %p101 = scmp.eq.s32.totalorder %s18, 0
    %p102 = por %p100, %p101
    %p103 = scmp.ne.s32.totalorder %s91, %s92
    %p104 = scmp.eq.s32.totalorder %s19, 1
    %p105 = por %p103, %p104
    %p107 = scmp.ne.s32.totalorder %s92, %s106
    %p108 = scmp.eq.s32.totalorder %s19, 0
    %p109 = por %p107, %p108
    %s111 = sadd.s32 %s110, 1
    %p114 = scmp.eq.s32.totalorder %s13, 1
    %p115 = scmp.ne.s32.totalorder %s110, %s112
    %p116 = scmp.eq.s32.totalorder %s13, 0
    %p117 = por %p115, %p116
    %p118 = scmp.ne.s32.totalorder %s110, %s112
    %p119 = scmp.eq.s32.totalorder %s18, 1
    %p120 = por %p118, %p119
    %p121 = scmp.ne.s32.totalorder %s112, %s113
    %p122 = scmp.eq.s32.totalorder %s18, 0
    %p123 = por %p121, %p122
    %p124 = scmp.ne.s32.totalorder %s112, %s113
    %p125 = scmp.eq.s32.totalorder %s19, 1
    %p126 = por %p124, %p125
    %p128 = scmp.ne.s32.totalorder %s113, %s127
    %p129 = scmp.eq.s32.totalorder %s19, 0
    %p130 = por %p128, %p129
    %s132 = sadd.s32 %s131, 1
    %p135 = scmp.eq.s32.totalorder %s13, 1
    %p136 = scmp.ne.s32.totalorder %s131, %s133
    %p137 = scmp.eq.s32.totalorder %s13, 0
    %p138 = por %p136, %p137
    %p139 = scmp.ne.s32.totalorder %s131, %s133
    %p140 = scmp.eq.s32.totalorder %s18, 1
    %p141 = por %p139, %p140
    %p142 = scmp.ne.s32.totalorder %s133, %s134
    %p143 = scmp.eq.s32.totalorder %s18, 0
    %p144 = por %p142, %p143
    %p145 = scmp.ne.s32.totalorder %s133, %s134
    %p146 = scmp.eq.s32.totalorder %s19, 1
    %p147 = por %p145, %p146
    %p149 = scmp.ne.s32.totalorder %s134, %s148
    %p150 = scmp.eq.s32.totalorder %s19, 0
    %p151 = por %p149, %p150
    %s153 = sadd.s32 %s152, 1
    %p156 = scmp.eq.s32.totalorder %s13, 1
    %p157 = scmp.ne.s32.totalorder %s152, %s154
    %p158 = scmp.eq.s32.totalorder %s13, 0
    %p159 = por %p157, %p158
    %p160 = scmp.ne.s32.totalorder %s152, %s154
    %p161 = scmp.eq.s32.totalorder %s18, 1
    %p162 = por %p160, %p161
    %p163 = scmp.ne.s32.totalorder %s154, %s155
    %p164 = scmp.eq.s32.totalorder %s18, 0
    %p165 = por %p163, %p164
    %p166 = scmp.ne.s32.totalorder %s154, %s155
    %p167 = scmp.eq.s32.totalorder %s19, 1
    %p168 = por %p166, %p167
    %p170 = scmp.ne.s32.totalorder %s155, %s169
    %p171 = scmp.eq.s32.totalorder %s19, 0
    %p172 = por %p170, %p171
    %s173 = ssub.s32 %s13, %s20
    %p174 = scmp.eq.s32.totalorder %s173, 0
    %s176 = sadd.s32 %s175, 1
    %s177 = scalar_select %p174, %s175, %s176
    %p180 = pneg %p174
    %p181 = scmp.eq.s32.totalorder %s13, 1
    %p182 = por %p180, %p181
    %p183 = scmp.ne.s32.totalorder %s175, %s178
    %p184 = scmp.eq.s32.totalorder %s13, 0
    %p185 = por %p183, %p184
    %p186 = scmp.ne.s32.totalorder %s175, %s178
    %p187 = scmp.eq.s32.totalorder %s18, 1
    %p188 = por %p186, %p187
    %p189 = scmp.ne.s32.totalorder %s178, %s179
    %p190 = scmp.eq.s32.totalorder %s18, 0
    %p191 = por %p189, %p190
    %p192 = scmp.ne.s32.totalorder %s178, %s179
    %p193 = scmp.eq.s32.totalorder %s19, 1
    %p194 = por %p192, %p193
    %p196 = scmp.ne.s32.totalorder %s179, %s195
    %p197 = scmp.eq.s32.totalorder %s19, 0
    %p198 = por %p196, %p197
    %p199 = scmp.le.s32.totalorder 1, %s13
    %p200 = scmp.lt.s32.totalorder %s13, 3
    %p201 = pnand %p199, %p200
    %p202 = pneg %p201
    // Predicated region
    $region9: #{dann_forward.1} parent=5 // pred_check
      _
    $region10: #{dann_forward.1} parent=5 // pred_check_branch
      %204 = sbr.rel (%p201) target = $region12
    $region11: #{dann_forward.1} parent=5 // pred_region
      %s205 = ssub.s32 %s13, 1
      // Predicated region
      $region13: #{dann_forward.1} parent=11 // pred_check
        %p206 = pneg %p60
      $region14: #{dann_forward.1} parent=11 // pred_check_branch
        %208 = sbr.rel (%p206) target = $region16
      $region15: #{dann_forward.1} parent=11 // pred_region
        _
      $region16: #{dann_forward.1} parent=11 // pred_fallthru
        _
      // Predicated region
      $region17: #{dann_forward.1} parent=11 // pred_check
        %p209 = pneg %p81
      $region18: #{dann_forward.1} parent=11 // pred_check_branch
        %211 = sbr.rel (%p209) target = $region20
      $region19: #{dann_forward.1} parent=11 // pred_region
        _
      $region20: #{dann_forward.1} parent=11 // pred_fallthru
        _
      // Predicated region
      $region21: #{dann_forward.1} parent=11 // pred_check
        %p212 = pneg %p102
      $region22: #{dann_forward.1} parent=11 // pred_check_branch
        %214 = sbr.rel (%p212) target = $region24
      $region23: #{dann_forward.1} parent=11 // pred_region
        _
      $region24: #{dann_forward.1} parent=11 // pred_fallthru
        _
      // Predicated region
      $region25: #{dann_forward.1} parent=11 // pred_check
        %p215 = pneg %p123
      $region26: #{dann_forward.1} parent=11 // pred_check_branch
        %217 = sbr.rel (%p215) target = $region28
      $region27: #{dann_forward.1} parent=11 // pred_region
        _
      $region28: #{dann_forward.1} parent=11 // pred_fallthru
        _
      // Predicated region
      $region29: #{dann_forward.1} parent=11 // pred_check
        %p218 = pneg %p144
      $region30: #{dann_forward.1} parent=11 // pred_check_branch
        %220 = sbr.rel (%p218) target = $region32
      $region31: #{dann_forward.1} parent=11 // pred_region
        _
      $region32: #{dann_forward.1} parent=11 // pred_fallthru
        _
      // Predicated region
      $region33: #{dann_forward.1} parent=11 // pred_check
        %p221 = pneg %p165
      $region34: #{dann_forward.1} parent=11 // pred_check_branch
        %223 = sbr.rel (%p221) target = $region36
      $region35: #{dann_forward.1} parent=11 // pred_region
        _
      $region36: #{dann_forward.1} parent=11 // pred_fallthru
        _
    $region12: #{dann_forward.1} parent=5 // pred_fallthru
      _
    %p224 = scmp.lt.s32.totalorder %s13, 2
    // Predicated region
    $region37: #{dann_forward.1} parent=5 // pred_check
      %p225 = pneg %p224
    $region38: #{dann_forward.1} parent=5 // pred_check_branch
      %227 = sbr.rel (%p225) target = $region40
    $region39: #{dann_forward.1} parent=5 // pred_region
      // Predicated region
      $region41: #{dann_forward.1} parent=39 // pred_check
        %p228 = pneg %p33
      $region42: #{dann_forward.1} parent=39 // pred_check_branch
        %230 = sbr.rel (%p228) target = $region44
      $region43: #{dann_forward.1} parent=39 // pred_region
        %s231 = smul.u32 8, %s13
        %p232 = scmp.lt.s32.totalorder %s231, 15
        %s233 = scalar_select %p232, %s231, 15
        %s234 = smul.addr %s233, 4
        %s235 = scalar_lea.vmem %s0, %s234
        %s236 = smul.u32 8, %s13
      $region44: #{dann_forward.1} parent=39 // pred_fallthru
        _
    $region40: #{dann_forward.1} parent=5 // pred_fallthru
      _
    %p237 = scmp.le.s32.totalorder 1, %s13
    %p238 = scmp.lt.s32.totalorder %s13, 3
    %p239 = pnand %p237, %p238
    %p240 = pneg %p239
    // Predicated region
    $region45: #{dann_forward.1} parent=5 // pred_check
      _
    $region46: #{dann_forward.1} parent=5 // pred_check_branch
      %242 = sbr.rel (%p239) target = $region48
    $region47: #{dann_forward.1} parent=5 // pred_region
      %s243 = ssub.s32 %s13, 1
      %s244 = smul.u32 8, %s18
      %p245 = scmp.lt.s32.totalorder %s244, 15
      %s246 = scalar_select %p245, %s244, 15
      %s247 = smul.addr %s246, 4
      %s248 = scalar_lea.vmem %s0, %s247
      %p249 = pneg %p39
      %p250 = pneg %p36
      %p251 = pneg %p60
      %p252 = pneg %p57
      %p253 = pneg %p81
      %p254 = pneg %p78
      %p255 = pneg %p102
      %p256 = pneg %p99
      %p257 = pneg %p123
      %p258 = pneg %p120
      %p259 = pneg %p144
      %p260 = pneg %p141
      %p261 = pneg %p165
      %p262 = pneg %p162
      %p263 = pneg %p191
      %p264 = pneg %p188
      %p265 = scmp.lt.s32.totalorder %s18, 1
      %s266 = scalar_select %p265, %s18, 1
      %s267 = smul.addr %s266, 8
      %s268 = scalar_lea.vmem %s7, %s267
      %s269 = smul.u32 8, %s18
      %p270 = scmp.lt.s32.totalorder %s269, 15
      %s271 = scalar_select %p270, %s269, 15
      %s272 = smul.addr %s271, 4
      %s273 = scalar_lea.vmem %s0, %s272
      %s274 = smul.u32 8, %s18
      %p275 = scmp.lt.s32.totalorder %s18, 1
      %s276 = scalar_select %p275, %s18, 1
      %s277 = smul.addr %s276, 8
      %s278 = scalar_lea.vmem %s7, %s277
      %v280 = vld [vmem:[%s273] sm:$0xf]
      %v281 = vld [vmem:[%s273 + $0x4] sm:$0xf]
      %v282 = vld [vmem:[%s273 + $0x8] sm:$0xf]
      %v283 = vld [vmem:[%s273 + $0xc] sm:$0xf]
      %v284 = vld [vmem:[%s273 + $0x10] sm:$0xf]
      %v285 = vld [vmem:[%s273 + $0x14] sm:$0xf]
      %v286 = vld [vmem:[%s273 + $0x18] sm:$0xf]
      %v287 = vld [vmem:[%s273 + $0x1c] sm:$0xf]
      %v288 = vld [vmem:[%s1] sm:$0xff]
      %v289 = vld [vmem:[%s1 + $0x8] sm:$0xff]
      %v290 = vld [vmem:[%s1 + $0x10] sm:$0xff]
      %v291 = vld [vmem:[%s1 + $0x18] sm:$0xff]
      %v292 = vld [vmem:[%s1 + $0x20] sm:$0xff]
      %v293 = vld [vmem:[%s1 + $0x28] sm:$0xff]
      %v294 = vld [vmem:[%s1 + $0x30] sm:$0xff]
      %v295 = vld [vmem:[%s1 + $0x38] sm:$0xff]
      %v296 = vld [vmem:[%s1 + $0x40] sm:$0xff]
      %v297 = vld [vmem:[%s1 + $0x48] sm:$0xff]
      %v298 = vld [vmem:[%s1 + $0x50] sm:$0xff]
      %v299 = vld [vmem:[%s1 + $0x58] sm:$0xff]
      %v300 = vld [vmem:[%s1 + $0x60] sm:$0xff]
      %v301 = vld [vmem:[%s1 + $0x68] sm:$0xff]
      %v302 = vld [vmem:[%s1 + $0x70] sm:$0xff]
      %v303 = vld [vmem:[%s1 + $0x78] sm:$0xff]
      %v304 = vld [vmem:[%s2] sm:$0x3]
      %v306 = vlaneseq
      %v307 = vshrl.u32 %v306, 7
      %v308 = vsub.s32 0, %v307
      %v309 = vrot.slane %v304, %v308
      %v310 = vlaneseq
      %v311 = vshrl.u32 %v310, 7
      %v312 = vsub.s32 1, %v311
      %v313 = vrot.slane %v304, %v312
      %v324 = vunpack.c.l.b16 %v280
      %v325 = vunpack.c.l.b16 %v281
      %v326 = vunpack.c.l.b16 %v282
      %v327 = vunpack.c.l.b16 %v283
      %v328 = vunpack.c.l.b16 %v284
      %v329 = vunpack.c.l.b16 %v285
      %v330 = vunpack.c.l.b16 %v286
      %v331 = vunpack.c.l.b16 %v287
      %v332 = vpack.c.b16 %v325, %v324
      %v333 = vpack.c.b16 %v327, %v326
      %v334 = vpack.c.b16 %v329, %v328
      %v335 = vpack.c.b16 %v331, %v330
      %v356 = vunpack.c.l.b16 %v288
      %v357 = vunpack.c.h.b16 %v288
      %v358 = vunpack.c.l.b16 %v289
      %v359 = vunpack.c.h.b16 %v289
      %v360 = vunpack.c.l.b16 %v290
      %v361 = vunpack.c.h.b16 %v290
      %v362 = vunpack.c.l.b16 %v291
      %v363 = vunpack.c.h.b16 %v291
      %v364 = vunpack.c.l.b16 %v292
      %v365 = vunpack.c.h.b16 %v292
      %v366 = vunpack.c.l.b16 %v293
      %v367 = vunpack.c.h.b16 %v293
      %v368 = vunpack.c.l.b16 %v294
      %v369 = vunpack.c.h.b16 %v294
      %v370 = vunpack.c.l.b16 %v295
      %v371 = vunpack.c.h.b16 %v295
      %v372 = vunpack.c.l.b16 %v296
      %v373 = vunpack.c.h.b16 %v296
      %v374 = vunpack.c.l.b16 %v297
      %v375 = vunpack.c.h.b16 %v297
      %v376 = vunpack.c.l.b16 %v298
      %v377 = vunpack.c.h.b16 %v298
      %v378 = vunpack.c.l.b16 %v299
      %v379 = vunpack.c.h.b16 %v299
      %v380 = vunpack.c.l.b16 %v300
      %v381 = vunpack.c.h.b16 %v300
      %v382 = vunpack.c.l.b16 %v301
      %v383 = vunpack.c.h.b16 %v301
      %v384 = vunpack.c.l.b16 %v302
      %v385 = vunpack.c.h.b16 %v302
      %v386 = vunpack.c.l.b16 %v303
      %v387 = vunpack.c.h.b16 %v303
      %v388 = vpack.c.b16 %v358, %v356
      %v389 = vpack.c.b16 %v359, %v357
      %v390 = vpack.c.b16 %v362, %v360
      %v391 = vpack.c.b16 %v363, %v361
      %v392 = vpack.c.b16 %v366, %v364
      %v393 = vpack.c.b16 %v367, %v365
      %v394 = vpack.c.b16 %v370, %v368
      %v395 = vpack.c.b16 %v371, %v369
      %v396 = vpack.c.b16 %v374, %v372
      %v397 = vpack.c.b16 %v375, %v373
      %v398 = vpack.c.b16 %v378, %v376
      %v399 = vpack.c.b16 %v379, %v377
      %v400 = vpack.c.b16 %v382, %v380
      %v401 = vpack.c.b16 %v383, %v381
      %v402 = vpack.c.b16 %v386, %v384
      %v403 = vpack.c.b16 %v387, %v385
      %420 = vmatprep.subr.bf16.mxu0 %v403
      %421 = vmatpush1.bf16.msra.mxu0 %v402
      %422 = vmatprep.subr.bf16.mxu0 %v401
      %423 = vmatpush1.bf16.msra.mxu0 %v400
      %424 = vmatprep.subr.bf16.mxu0 %v399
      %425 = vmatpush1.bf16.msra.mxu0 %v398
      %426 = vmatprep.subr.bf16.mxu0 %v397
      %427 = vmatpush1.bf16.msra.mxu0 %v396
      %428 = vmatprep.subr.bf16.mxu0 %v395
      %429 = vmatpush1.bf16.msra.mxu0 %v394
      %430 = vmatprep.subr.bf16.mxu0 %v393
      %431 = vmatpush1.bf16.msra.mxu0 %v392
      %432 = vmatprep.subr.bf16.mxu0 %v391
      %433 = vmatpush1.bf16.msra.mxu0 %v390
      %434 = vmatprep.subr.bf16.mxu0 %v389
      %435 = vmatpush1.bf16.msra.mxu0 %v388
      %436 = vmatprep.subr.bf16.mxu0 0
      %437 = vmatpush2.bf16.msra.mxu0 0
      %438 = vmatprep.subr.bf16.mxu0 0
      %439 = vmatpush2.bf16.msra.mxu0 0
      %440 = vmatprep.subr.bf16.mxu0 0
      %441 = vmatpush2.bf16.msra.mxu0 0
      %442 = vmatprep.subr.bf16.mxu0 0
      %443 = vmatpush2.bf16.msra.mxu0 0
      %444 = vmatprep.subr.bf16.mxu0 0
      %445 = vmatpush2.bf16.msra.mxu0 0
      %446 = vmatprep.subr.bf16.mxu0 0
      %447 = vmatpush2.bf16.msra.mxu0 0
      %448 = vmatprep.subr.bf16.mxu0 0
      %449 = vmatpush2.bf16.msra.mxu0 0
      %450 = vmatprep.subr.bf16.mxu0 0
      %451 = vmatpush2.bf16.msra.mxu0 0
      %452 = vmatprep.mubr.bf16.mxu0 0
      %453 = vmatmul.mubr.bf16.gmra.mxu0 %v332
      %v454 = vpop.f32.mrf.mxu0
      %v455 = vadd.f32 %v309, %v454
      %v456 = vpop.f32.mrf.mxu0
      %v457 = vadd.f32 %v313, %v456
      %v458 = vpop.f32.mrf.mxu0
      %v459 = vadd.f32 %v309, %v458
      %v460 = vpop.f32.mrf.mxu0
      %v461 = vadd.f32 %v313, %v460
      %462 = vmatprep.mubr.bf16.mxu0 0
      %463 = vmatmul.mubr.bf16.gmra.mxu0 %v333
      %v464 = vpop.f32.mrf.mxu0
      %v465 = vadd.f32 %v309, %v464
      %v466 = vpop.f32.mrf.mxu0
      %v467 = vadd.f32 %v313, %v466
      %v468 = vpop.f32.mrf.mxu0
      %v469 = vadd.f32 %v309, %v468
      %v470 = vpop.f32.mrf.mxu0
      %v471 = vadd.f32 %v313, %v470
      %472 = vmatprep.mubr.bf16.mxu0 0
      %473 = vmatmul.mubr.bf16.gmra.mxu0 %v334
      %v474 = vpop.f32.mrf.mxu0
      %v475 = vadd.f32 %v309, %v474
      %v476 = vpop.f32.mrf.mxu0
      %v477 = vadd.f32 %v313, %v476
      %v478 = vpop.f32.mrf.mxu0
      %v479 = vadd.f32 %v309, %v478
      %v480 = vpop.f32.mrf.mxu0
      %v481 = vadd.f32 %v313, %v480
      %482 = vmatprep.mubr.bf16.mxu0 0
      %483 = vmatmul.mubr.bf16.gmra.mxu0 %v335
      %v484 = vpop.f32.mrf.mxu0
      %v485 = vadd.f32 %v309, %v484
      %v486 = vpop.f32.mrf.mxu0
      %v487 = vadd.f32 %v313, %v486
      %v488 = vpop.f32.mrf.mxu0
      %v489 = vadd.f32 %v309, %v488
      %v490 = vpop.f32.mrf.mxu0
      %v491 = vadd.f32 %v313, %v490
      %492 = vdwg.mxu0
      %v493 = vmax.f32 %v455, 0.0
      %v494 = vmax.f32 %v457, 0.0
      %v495 = vmax.f32 %v459, 0.0
      %v496 = vmax.f32 %v461, 0.0
      %v497 = vmax.f32 %v465, 0.0
      %v498 = vmax.f32 %v467, 0.0
      %v499 = vmax.f32 %v469, 0.0
      %v500 = vmax.f32 %v471, 0.0
      %v501 = vmax.f32 %v475, 0.0
      %v502 = vmax.f32 %v477, 0.0
      %v503 = vmax.f32 %v479, 0.0
      %v504 = vmax.f32 %v481, 0.0
      %v505 = vmax.f32 %v485, 0.0
      %v506 = vmax.f32 %v487, 0.0
      %v507 = vmax.f32 %v489, 0.0
      %v508 = vmax.f32 %v491, 0.0
      %v525 = vcombine.low %v493, %v494
      %v526 = vcombine.high %v493, %v494
      %v527 = vcombine.low %v495, %v496
      %v528 = vcombine.high %v495, %v496
      %v529 = vcombine.low %v497, %v498
      %v530 = vcombine.high %v497, %v498
      %v531 = vcombine.low %v499, %v500
      %v532 = vcombine.high %v499, %v500
      %v533 = vcombine.low %v501, %v502
      %v534 = vcombine.high %v501, %v502
      %v535 = vcombine.low %v503, %v504
      %v536 = vcombine.high %v503, %v504
      %v537 = vcombine.low %v505, %v506
      %v538 = vcombine.high %v505, %v506
      %v539 = vcombine.low %v507, %v508
      %v540 = vcombine.high %v507, %v508
      %v558 = vunpack.c.l.s4 1935823168
      %v559 = vunpack.c.0.s8 %v558
      %v560 = vlaneseq
      %v561 = vshrl.u32 %v560, 7
      %v562 = vsub.s32 %v559, %v561
      %v563 = vrot.slane %v525, %v562
      %v565 = vunpack.c.l.s4 1935823168
      %v566 = vunpack.c.0.s8 %v565
      %v567 = vlaneseq
      %v568 = vshrl.u32 %v567, 7
      %v569 = vsub.s32 %v566, %v568
      %v570 = vrot.slane %v526, %v569
      %v572 = vunpack.c.l.s4 1935823168
      %v573 = vunpack.c.0.s8 %v572
      %v574 = vlaneseq
      %v575 = vshrl.u32 %v574, 7
      %v576 = vsub.s32 %v573, %v575
      %v577 = vrot.slane %v527, %v576
      %v579 = vunpack.c.l.s4 1935823168
      %v580 = vunpack.c.0.s8 %v579
      %v581 = vlaneseq
      %v582 = vshrl.u32 %v581, 7
      %v583 = vsub.s32 %v580, %v582
      %v584 = vrot.slane %v528, %v583
      %v586 = vunpack.c.l.s4 1935823168
      %v587 = vunpack.c.0.s8 %v586
      %v588 = vlaneseq
      %v589 = vshrl.u32 %v588, 7
      %v590 = vsub.s32 %v587, %v589
      %v591 = vrot.slane %v529, %v590
      %v593 = vunpack.c.l.s4 1935823168
      %v594 = vunpack.c.0.s8 %v593
      %v595 = vlaneseq
      %v596 = vshrl.u32 %v595, 7
      %v597 = vsub.s32 %v594, %v596
      %v598 = vrot.slane %v530, %v597
      %v600 = vunpack.c.l.s4 1935823168
      %v601 = vunpack.c.0.s8 %v600
      %v602 = vlaneseq
      %v603 = vshrl.u32 %v602, 7
      %v604 = vsub.s32 %v601, %v603
      %v605 = vrot.slane %v531, %v604
      %v607 = vunpack.c.l.s4 1935823168
      %v608 = vunpack.c.0.s8 %v607
      %v609 = vlaneseq
      %v610 = vshrl.u32 %v609, 7
      %v611 = vsub.s32 %v608, %v610
      %v612 = vrot.slane %v532, %v611
      %v614 = vunpack.c.l.s4 1935823168
      %v615 = vunpack.c.0.s8 %v614
      %v616 = vlaneseq
      %v617 = vshrl.u32 %v616, 7
      %v618 = vsub.s32 %v615, %v617
      %v619 = vrot.slane %v533, %v618
      %v621 = vunpack.c.l.s4 1935823168
      %v622 = vunpack.c.0.s8 %v621
      %v623 = vlaneseq
      %v624 = vshrl.u32 %v623, 7
      %v625 = vsub.s32 %v622, %v624
      %v626 = vrot.slane %v534, %v625
      %v628 = vunpack.c.l.s4 1935823168
      %v629 = vunpack.c.0.s8 %v628
      %v630 = vlaneseq
      %v631 = vshrl.u32 %v630, 7
      %v632 = vsub.s32 %v629, %v631
      %v633 = vrot.slane %v535, %v632
      %v635 = vunpack.c.l.s4 1935823168
      %v636 = vunpack.c.0.s8 %v635
      %v637 = vlaneseq
      %v638 = vshrl.u32 %v637, 7
      %v639 = vsub.s32 %v636, %v638
      %v640 = vrot.slane %v536, %v639
      %v642 = vunpack.c.l.s4 1935823168
      %v643 = vunpack.c.0.s8 %v642
      %v644 = vlaneseq
      %v645 = vshrl.u32 %v644, 7
      %v646 = vsub.s32 %v643, %v645
      %v647 = vrot.slane %v537, %v646
      %v649 = vunpack.c.l.s4 1935823168
      %v650 = vunpack.c.0.s8 %v649
      %v651 = vlaneseq
      %v652 = vshrl.u32 %v651, 7
      %v653 = vsub.s32 %v650, %v652
      %v654 = vrot.slane %v538, %v653
      %v656 = vunpack.c.l.s4 1935823168
      %v657 = vunpack.c.0.s8 %v656
      %v658 = vlaneseq
      %v659 = vshrl.u32 %v658, 7
      %v660 = vsub.s32 %v657, %v659
      %v661 = vrot.slane %v539, %v660
      %v663 = vunpack.c.l.s4 1935823168
      %v664 = vunpack.c.0.s8 %v663
      %v665 = vlaneseq
      %v666 = vshrl.u32 %v665, 7
      %v667 = vsub.s32 %v664, %v666
      %v668 = vrot.slane %v540, %v667
      %v685 = vcombine.low %v563, %v577
      %v686 = vcombine.high %v563, %v577
      %v687 = vcombine.low %v591, %v605
      %v688 = vcombine.high %v591, %v605
      %v689 = vcombine.low %v619, %v633
      %v690 = vcombine.high %v619, %v633
      %v691 = vcombine.low %v647, %v661
      %v692 = vcombine.high %v647, %v661
      %v694 = vunpack.c.l.s4 1966171168
      %v695 = vunpack.c.0.s8 %v694
      %v696 = vlaneseq
      %v697 = vshrl.u32 %v696, 7
      %v698 = vsub.s32 %v695, %v697
      %v699 = vrot.slane %v685, %v698
      %v701 = vunpack.c.l.s4 1966171168
      %v702 = vunpack.c.0.s8 %v701
      %v703 = vlaneseq
      %v704 = vshrl.u32 %v703, 7
      %v705 = vsub.s32 %v702, %v704
      %v706 = vrot.slane %v686, %v705
      %v708 = vunpack.c.l.s4 1966171168
      %v709 = vunpack.c.0.s8 %v708
      %v710 = vlaneseq
      %v711 = vshrl.u32 %v710, 7
      %v712 = vsub.s32 %v709, %v711
      %v713 = vrot.slane %v687, %v712
      %v715 = vunpack.c.l.s4 1966171168
      %v716 = vunpack.c.0.s8 %v715
      %v717 = vlaneseq
      %v718 = vshrl.u32 %v717, 7
      %v719 = vsub.s32 %v716, %v718
      %v720 = vrot.slane %v688, %v719
      %v722 = vunpack.c.l.s4 1966171168
      %v723 = vunpack.c.0.s8 %v722
      %v724 = vlaneseq
      %v725 = vshrl.u32 %v724, 7
      %v726 = vsub.s32 %v723, %v725
      %v727 = vrot.slane %v689, %v726
      %v729 = vunpack.c.l.s4 1966171168
      %v730 = vunpack.c.0.s8 %v729
      %v731 = vlaneseq
      %v732 = vshrl.u32 %v731, 7
      %v733 = vsub.s32 %v730, %v732
      %v734 = vrot.slane %v690, %v733
      %v736 = vunpack.c.l.s4 1966171168
      %v737 = vunpack.c.0.s8 %v736
      %v738 = vlaneseq
      %v739 = vshrl.u32 %v738, 7
      %v740 = vsub.s32 %v737, %v739
      %v741 = vrot.slane %v691, %v740
      %v743 = vunpack.c.l.s4 1966171168
      %v744 = vunpack.c.0.s8 %v743
      %v745 = vlaneseq
      %v746 = vshrl.u32 %v745, 7
      %v747 = vsub.s32 %v744, %v746
      %v748 = vrot.slane %v692, %v747
      %v749 = vcombine.low %v699, %v713
      %v750 = vcombine.high %v699, %v713
      %v751 = vcombine.low %v706, %v720
      %v752 = vcombine.high %v706, %v720
      %v753 = vcombine.low %v727, %v741
      %v754 = vcombine.high %v727, %v741
      %v755 = vcombine.low %v734, %v748
      %v756 = vcombine.high %v734, %v748
      %v758 = vunpack.c.l.s4 1966171168
      %v759 = vunpack.c.0.s8 %v758
      %v760 = vlaneseq
      %v761 = vshrl.u32 %v760, 7
      %v762 = vsub.s32 %v759, %v761
      %v763 = vrot.slane %v749, %v762
      %v765 = vunpack.c.l.s4 1966171168
      %v766 = vunpack.c.0.s8 %v765
      %v767 = vlaneseq
      %v768 = vshrl.u32 %v767, 7
      %v769 = vsub.s32 %v766, %v768
      %v770 = vrot.slane %v751, %v769
      %v772 = vunpack.c.l.s4 1966171168
      %v773 = vunpack.c.0.s8 %v772
      %v774 = vlaneseq
      %v775 = vshrl.u32 %v774, 7
      %v776 = vsub.s32 %v773, %v775
      %v777 = vrot.slane %v750, %v776
      %v779 = vunpack.c.l.s4 1966171168
      %v780 = vunpack.c.0.s8 %v779
      %v781 = vlaneseq
      %v782 = vshrl.u32 %v781, 7
      %v783 = vsub.s32 %v780, %v782
      %v784 = vrot.slane %v752, %v783
      %v786 = vunpack.c.l.s4 1966171168
      %v787 = vunpack.c.0.s8 %v786
      %v788 = vlaneseq
      %v789 = vshrl.u32 %v788, 7
      %v790 = vsub.s32 %v787, %v789
      %v791 = vrot.slane %v753, %v790
      %v793 = vunpack.c.l.s4 1966171168
      %v794 = vunpack.c.0.s8 %v793
      %v795 = vlaneseq
      %v796 = vshrl.u32 %v795, 7
      %v797 = vsub.s32 %v794, %v796
      %v798 = vrot.slane %v755, %v797
      %v800 = vunpack.c.l.s4 1966171168
      %v801 = vunpack.c.0.s8 %v800
      %v802 = vlaneseq
      %v803 = vshrl.u32 %v802, 7
      %v804 = vsub.s32 %v801, %v803
      %v805 = vrot.slane %v754, %v804
      %v807 = vunpack.c.l.s4 1966171168
      %v808 = vunpack.c.0.s8 %v807
      %v809 = vlaneseq
      %v810 = vshrl.u32 %v809, 7
      %v811 = vsub.s32 %v808, %v810
      %v812 = vrot.slane %v756, %v811
      %v813 = vcombine.low %v763, %v791
      %v814 = vcombine.high %v763, %v791
      %v815 = vcombine.low %v770, %v798
      %v816 = vcombine.high %v770, %v798
      %v817 = vcombine.low %v777, %v805
      %v818 = vcombine.high %v777, %v805
      %v819 = vcombine.low %v784, %v812
      %v820 = vcombine.high %v784, %v812
      %v821 = vcombine.low %v570, %v584
      %v822 = vcombine.high %v570, %v584
      %v823 = vcombine.low %v598, %v612
      %v824 = vcombine.high %v598, %v612
      %v825 = vcombine.low %v626, %v640
      %v826 = vcombine.high %v626, %v640
      %v827 = vcombine.low %v654, %v668
      %v828 = vcombine.high %v654, %v668
      %v830 = vunpack.c.l.s4 1966171168
      %v831 = vunpack.c.0.s8 %v830
      %v832 = vlaneseq
      %v833 = vshrl.u32 %v832, 7
      %v834 = vsub.s32 %v831, %v833
      %v835 = vrot.slane %v821, %v834
      %v837 = vunpack.c.l.s4 1966171168
      %v838 = vunpack.c.0.s8 %v837
      %v839 = vlaneseq
      %v840 = vshrl.u32 %v839, 7
      %v841 = vsub.s32 %v838, %v840
      %v842 = vrot.slane %v822, %v841
      %v844 = vunpack.c.l.s4 1966171168
      %v845 = vunpack.c.0.s8 %v844
      %v846 = vlaneseq
      %v847 = vshrl.u32 %v846, 7
      %v848 = vsub.s32 %v845, %v847
      %v849 = vrot.slane %v823, %v848
      %v851 = vunpack.c.l.s4 1966171168
      %v852 = vunpack.c.0.s8 %v851
      %v853 = vlaneseq
      %v854 = vshrl.u32 %v853, 7
      %v855 = vsub.s32 %v852, %v854
      %v856 = vrot.slane %v824, %v855
      %v858 = vunpack.c.l.s4 1966171168
      %v859 = vunpack.c.0.s8 %v858
      %v860 = vlaneseq
      %v861 = vshrl.u32 %v860, 7
      %v862 = vsub.s32 %v859, %v861
      %v863 = vrot.slane %v825, %v862
      %v865 = vunpack.c.l.s4 1966171168
      %v866 = vunpack.c.0.s8 %v865
      %v867 = vlaneseq
      %v868 = vshrl.u32 %v867, 7
      %v869 = vsub.s32 %v866, %v868
      %v870 = vrot.slane %v826, %v869
      %v872 = vunpack.c.l.s4 1966171168
      %v873 = vunpack.c.0.s8 %v872
      %v874 = vlaneseq
      %v875 = vshrl.u32 %v874, 7
      %v876 = vsub.s32 %v873, %v875
      %v877 = vrot.slane %v827, %v876
      %v879 = vunpack.c.l.s4 1966171168
      %v880 = vunpack.c.0.s8 %v879
      %v881 = vlaneseq
      %v882 = vshrl.u32 %v881, 7
      %v883 = vsub.s32 %v880, %v882
      %v884 = vrot.slane %v828, %v883
      %v885 = vcombine.low %v835, %v849
      %v886 = vcombine.high %v835, %v849
      %v887 = vcombine.low %v842, %v856
      %v888 = vcombine.high %v842, %v856
      %v889 = vcombine.low %v863, %v877
      %v890 = vcombine.high %v863, %v877
      %v891 = vcombine.low %v870, %v884
      %v892 = vcombine.high %v870, %v884
      %v894 = vunpack.c.l.s4 1966171168
      %v895 = vunpack.c.0.s8 %v894
      %v896 = vlaneseq
      %v897 = vshrl.u32 %v896, 7
      %v898 = vsub.s32 %v895, %v897
      %v899 = vrot.slane %v885, %v898
      %v901 = vunpack.c.l.s4 1966171168
      %v902 = vunpack.c.0.s8 %v901
      %v903 = vlaneseq
      %v904 = vshrl.u32 %v903, 7
      %v905 = vsub.s32 %v902, %v904
      %v906 = vrot.slane %v887, %v905
      %v908 = vunpack.c.l.s4 1966171168
      %v909 = vunpack.c.0.s8 %v908
      %v910 = vlaneseq
      %v911 = vshrl.u32 %v910, 7
      %v912 = vsub.s32 %v909, %v911
      %v913 = vrot.slane %v886, %v912
      %v915 = vunpack.c.l.s4 1966171168
      %v916 = vunpack.c.0.s8 %v915
      %v917 = vlaneseq
      %v918 = vshrl.u32 %v917, 7
      %v919 = vsub.s32 %v916, %v918
      %v920 = vrot.slane %v888, %v919
      %v922 = vunpack.c.l.s4 1966171168
      %v923 = vunpack.c.0.s8 %v922
      %v924 = vlaneseq
      %v925 = vshrl.u32 %v924, 7
      %v926 = vsub.s32 %v923, %v925
      %v927 = vrot.slane %v889, %v926
      %v929 = vunpack.c.l.s4 1966171168
      %v930 = vunpack.c.0.s8 %v929
      %v931 = vlaneseq
      %v932 = vshrl.u32 %v931, 7
      %v933 = vsub.s32 %v930, %v932
      %v934 = vrot.slane %v891, %v933
      %v936 = vunpack.c.l.s4 1966171168
      %v937 = vunpack.c.0.s8 %v936
      %v938 = vlaneseq
      %v939 = vshrl.u32 %v938, 7
      %v940 = vsub.s32 %v937, %v939
      %v941 = vrot.slane %v890, %v940
      %v943 = vunpack.c.l.s4 1966171168
      %v944 = vunpack.c.0.s8 %v943
      %v945 = vlaneseq
      %v946 = vshrl.u32 %v945, 7
      %v947 = vsub.s32 %v944, %v946
      %v948 = vrot.slane %v892, %v947
      %v949 = vcombine.low %v899, %v927
      %v950 = vcombine.high %v899, %v927
      %v951 = vcombine.low %v906, %v934
      %v952 = vcombine.high %v906, %v934
      %v953 = vcombine.low %v913, %v941
      %v954 = vcombine.high %v913, %v941
      %v955 = vcombine.low %v920, %v948
      %v956 = vcombine.high %v920, %v948
      %v973 = vpack.c.bf16 %v813, %v813
      %v974 = vpack.c.bf16 %v817, %v817
      %v975 = vpack.c.bf16 %v814, %v814
      %v976 = vpack.c.bf16 %v818, %v818
      %v977 = vpack.c.bf16 %v815, %v815
      %v978 = vpack.c.bf16 %v819, %v819
      %v979 = vpack.c.bf16 %v816, %v816
      %v980 = vpack.c.bf16 %v820, %v820
      %v981 = vpack.c.bf16 %v949, %v949
      %v982 = vpack.c.bf16 %v953, %v953
      %v983 = vpack.c.bf16 %v950, %v950
      %v984 = vpack.c.bf16 %v954, %v954
      %v985 = vpack.c.bf16 %v951, %v951
      %v986 = vpack.c.bf16 %v955, %v955
      %v987 = vpack.c.bf16 %v952, %v952
      %v988 = vpack.c.bf16 %v956, %v956
      %v989 = vld [vmem:[%s3] sm:$0xf]
      %v990 = vld [vmem:[%s3 + $0x4] sm:$0xf]
      %v991 = vld [vmem:[%s3 + $0x8] sm:$0xf]
      %v992 = vld [vmem:[%s3 + $0xc] sm:$0xf]
      %v993 = vld [vmem:[%s3 + $0x10] sm:$0xf]
      %v994 = vld [vmem:[%s3 + $0x14] sm:$0xf]
      %v995 = vld [vmem:[%s3 + $0x18] sm:$0xf]
      %v996 = vld [vmem:[%s3 + $0x1c] sm:$0xf]
      %v997 = vld [vmem:[%s3 + $0x20] sm:$0xf]
      %v998 = vld [vmem:[%s3 + $0x24] sm:$0xf]
      %v999 = vld [vmem:[%s3 + $0x28] sm:$0xf]
      %v1000 = vld [vmem:[%s3 + $0x2c] sm:$0xf]
      %v1001 = vld [vmem:[%s3 + $0x30] sm:$0xf]
      %v1002 = vld [vmem:[%s3 + $0x34] sm:$0xf]
      %v1003 = vld [vmem:[%s3 + $0x38] sm:$0xf]
      %v1004 = vld [vmem:[%s3 + $0x3c] sm:$0xf]
      %v1005 = vld [vmem:[%s3 + $0x40] sm:$0xf]
      %v1006 = vld [vmem:[%s3 + $0x44] sm:$0xf]
      %v1007 = vld [vmem:[%s3 + $0x48] sm:$0xf]
      %v1008 = vld [vmem:[%s3 + $0x4c] sm:$0xf]
      %v1009 = vld [vmem:[%s3 + $0x50] sm:$0xf]
      %v1010 = vld [vmem:[%s3 + $0x54] sm:$0xf]
      %v1011 = vld [vmem:[%s3 + $0x58] sm:$0xf]
      %v1012 = vld [vmem:[%s3 + $0x5c] sm:$0xf]
      %v1013 = vld [vmem:[%s3 + $0x60] sm:$0xf]
      %v1014 = vld [vmem:[%s3 + $0x64] sm:$0xf]
      %v1015 = vld [vmem:[%s3 + $0x68] sm:$0xf]
      %v1016 = vld [vmem:[%s3 + $0x6c] sm:$0xf]
      %v1017 = vld [vmem:[%s3 + $0x70] sm:$0xf]
      %v1018 = vld [vmem:[%s3 + $0x74] sm:$0xf]
      %v1019 = vld [vmem:[%s3 + $0x78] sm:$0xf]
      %v1020 = vld [vmem:[%s3 + $0x7c] sm:$0xf]
      %v1021 = vld [vmem:[%s3 + $0x80] sm:$0xf]
      %v1022 = vld [vmem:[%s3 + $0x84] sm:$0xf]
      %v1023 = vld [vmem:[%s3 + $0x88] sm:$0xf]
      %v1024 = vld [vmem:[%s3 + $0x8c] sm:$0xf]
      %v1025 = vld [vmem:[%s3 + $0x90] sm:$0xf]
      %v1026 = vld [vmem:[%s3 + $0x94] sm:$0xf]
      %v1027 = vld [vmem:[%s3 + $0x98] sm:$0xf]
      %v1028 = vld [vmem:[%s3 + $0x9c] sm:$0xf]
      %v1029 = vld [vmem:[%s3 + $0xa0] sm:$0xf]
      %v1030 = vld [vmem:[%s3 + $0xa4] sm:$0xf]
      %v1031 = vld [vmem:[%s3 + $0xa8] sm:$0xf]
      %v1032 = vld [vmem:[%s3 + $0xac] sm:$0xf]
      %v1033 = vld [vmem:[%s3 + $0xb0] sm:$0xf]
      %v1034 = vld [vmem:[%s3 + $0xb4] sm:$0xf]
      %v1035 = vld [vmem:[%s3 + $0xb8] sm:$0xf]
      %v1036 = vld [vmem:[%s3 + $0xbc] sm:$0xf]
      %v1037 = vld [vmem:[%s3 + $0xc0] sm:$0xf]
      %v1038 = vld [vmem:[%s3 + $0xc4] sm:$0xf]
      %v1039 = vld [vmem:[%s3 + $0xc8] sm:$0xf]
      %v1040 = vld [vmem:[%s3 + $0xcc] sm:$0xf]
      %v1041 = vld [vmem:[%s3 + $0xd0] sm:$0xf]
      %v1042 = vld [vmem:[%s3 + $0xd4] sm:$0xf]
      %v1043 = vld [vmem:[%s3 + $0xd8] sm:$0xf]
      %v1044 = vld [vmem:[%s3 + $0xdc] sm:$0xf]
      %v1045 = vld [vmem:[%s3 + $0xe0] sm:$0xf]
      %v1046 = vld [vmem:[%s3 + $0xe4] sm:$0xf]
      %v1047 = vld [vmem:[%s3 + $0xe8] sm:$0xf]
      %v1048 = vld [vmem:[%s3 + $0xec] sm:$0xf]
      %v1049 = vld [vmem:[%s3 + $0xf0] sm:$0xf]
      %v1050 = vld [vmem:[%s3 + $0xf4] sm:$0xf]
      %v1051 = vld [vmem:[%s3 + $0xf8] sm:$0xf]
      %v1052 = vld [vmem:[%s3 + $0xfc] sm:$0xf]
      %v1053 = vld [vmem:[%s3 + $0x100] sm:$0xf]
      %v1054 = vld [vmem:[%s3 + $0x104] sm:$0xf]
      %v1055 = vld [vmem:[%s3 + $0x108] sm:$0xf]
      %v1056 = vld [vmem:[%s3 + $0x10c] sm:$0xf]
      %v1057 = vld [vmem:[%s3 + $0x110] sm:$0xf]
      %v1058 = vld [vmem:[%s3 + $0x114] sm:$0xf]
      %v1059 = vld [vmem:[%s3 + $0x118] sm:$0xf]
      %v1060 = vld [vmem:[%s3 + $0x11c] sm:$0xf]
      %v1061 = vld [vmem:[%s3 + $0x120] sm:$0xf]
      %v1062 = vld [vmem:[%s3 + $0x124] sm:$0xf]
      %v1063 = vld [vmem:[%s3 + $0x128] sm:$0xf]
      %v1064 = vld [vmem:[%s3 + $0x12c] sm:$0xf]
      %v1065 = vld [vmem:[%s3 + $0x130] sm:$0xf]
      %v1066 = vld [vmem:[%s3 + $0x134] sm:$0xf]
      %v1067 = vld [vmem:[%s3 + $0x138] sm:$0xf]
      %v1068 = vld [vmem:[%s3 + $0x13c] sm:$0xf]
      %v1069 = vld [vmem:[%s3 + $0x140] sm:$0xf]
      %v1070 = vld [vmem:[%s3 + $0x144] sm:$0xf]
      %v1071 = vld [vmem:[%s3 + $0x148] sm:$0xf]
      %v1072 = vld [vmem:[%s3 + $0x14c] sm:$0xf]
      %v1073 = vld [vmem:[%s3 + $0x150] sm:$0xf]
      %v1074 = vld [vmem:[%s3 + $0x154] sm:$0xf]
      %v1075 = vld [vmem:[%s3 + $0x158] sm:$0xf]
      %v1076 = vld [vmem:[%s3 + $0x15c] sm:$0xf]
      %v1077 = vld [vmem:[%s3 + $0x160] sm:$0xf]
      %v1078 = vld [vmem:[%s3 + $0x164] sm:$0xf]
      %v1079 = vld [vmem:[%s3 + $0x168] sm:$0xf]
      %v1080 = vld [vmem:[%s3 + $0x16c] sm:$0xf]
      %v1081 = vld [vmem:[%s3 + $0x170] sm:$0xf]
      %v1082 = vld [vmem:[%s3 + $0x174] sm:$0xf]
      %v1083 = vld [vmem:[%s3 + $0x178] sm:$0xf]
      %v1084 = vld [vmem:[%s3 + $0x17c] sm:$0xf]
      %v1085 = vld [vmem:[%s3 + $0x180] sm:$0xf]
      %v1086 = vld [vmem:[%s3 + $0x184] sm:$0xf]
      %v1087 = vld [vmem:[%s3 + $0x188] sm:$0xf]
      %v1088 = vld [vmem:[%s3 + $0x18c] sm:$0xf]
      %v1089 = vld [vmem:[%s3 + $0x190] sm:$0xf]
      %v1090 = vld [vmem:[%s3 + $0x194] sm:$0xf]
      %v1091 = vld [vmem:[%s3 + $0x198] sm:$0xf]
      %v1092 = vld [vmem:[%s3 + $0x19c] sm:$0xf]
      %v1093 = vld [vmem:[%s3 + $0x1a0] sm:$0xf]
      %v1094 = vld [vmem:[%s3 + $0x1a4] sm:$0xf]
      %v1095 = vld [vmem:[%s3 + $0x1a8] sm:$0xf]
      %v1096 = vld [vmem:[%s3 + $0x1ac] sm:$0xf]
      %v1097 = vld [vmem:[%s3 + $0x1b0] sm:$0xf]
      %v1098 = vld [vmem:[%s3 + $0x1b4] sm:$0xf]
      %v1099 = vld [vmem:[%s3 + $0x1b8] sm:$0xf]
      %v1100 = vld [vmem:[%s3 + $0x1bc] sm:$0xf]
      %v1101 = vld [vmem:[%s3 + $0x1c0] sm:$0xf]
      %v1102 = vld [vmem:[%s3 + $0x1c4] sm:$0xf]
      %v1103 = vld [vmem:[%s3 + $0x1c8] sm:$0xf]
      %v1104 = vld [vmem:[%s3 + $0x1cc] sm:$0xf]
      %v1105 = vld [vmem:[%s3 + $0x1d0] sm:$0xf]
      %v1106 = vld [vmem:[%s3 + $0x1d4] sm:$0xf]
      %v1107 = vld [vmem:[%s3 + $0x1d8] sm:$0xf]
      %v1108 = vld [vmem:[%s3 + $0x1dc] sm:$0xf]
      %v1109 = vld [vmem:[%s3 + $0x1e0] sm:$0xf]
      %v1110 = vld [vmem:[%s3 + $0x1e4] sm:$0xf]
      %v1111 = vld [vmem:[%s3 + $0x1e8] sm:$0xf]
      %v1112 = vld [vmem:[%s3 + $0x1ec] sm:$0xf]
      %v1113 = vld [vmem:[%s3 + $0x1f0] sm:$0xf]
      %v1114 = vld [vmem:[%s3 + $0x1f4] sm:$0xf]
      %v1115 = vld [vmem:[%s3 + $0x1f8] sm:$0xf]
      %v1116 = vld [vmem:[%s3 + $0x1fc] sm:$0xf]
      %v1117 = vld [vmem:[%s3 + $0x200] sm:$0xf]
      %v1118 = vld [vmem:[%s3 + $0x204] sm:$0xf]
      %v1119 = vld [vmem:[%s3 + $0x208] sm:$0xf]
      %v1120 = vld [vmem:[%s3 + $0x20c] sm:$0xf]
      %v1121 = vld [vmem:[%s3 + $0x210] sm:$0xf]
      %v1122 = vld [vmem:[%s3 + $0x214] sm:$0xf]
      %v1123 = vld [vmem:[%s3 + $0x218] sm:$0xf]
      %v1124 = vld [vmem:[%s3 + $0x21c] sm:$0xf]
      %v1125 = vld [vmem:[%s3 + $0x220] sm:$0xf]
      %v1126 = vld [vmem:[%s3 + $0x224] sm:$0xf]
      %v1127 = vld [vmem:[%s3 + $0x228] sm:$0xf]
      %v1128 = vld [vmem:[%s3 + $0x22c] sm:$0xf]
      %v1129 = vld [vmem:[%s3 + $0x230] sm:$0xf]
      %v1130 = vld [vmem:[%s3 + $0x234] sm:$0xf]
      %v1131 = vld [vmem:[%s3 + $0x238] sm:$0xf]
      %v1132 = vld [vmem:[%s3 + $0x23c] sm:$0xf]
      %v1133 = vld [vmem:[%s3 + $0x240] sm:$0xf]
      %v1134 = vld [vmem:[%s3 + $0x244] sm:$0xf]
      %v1135 = vld [vmem:[%s3 + $0x248] sm:$0xf]
      %v1136 = vld [vmem:[%s3 + $0x24c] sm:$0xf]
      %v1137 = vld [vmem:[%s3 + $0x250] sm:$0xf]
      %v1138 = vld [vmem:[%s3 + $0x254] sm:$0xf]
      %v1139 = vld [vmem:[%s3 + $0x258] sm:$0xf]
      %v1140 = vld [vmem:[%s3 + $0x25c] sm:$0xf]
      %v1141 = vld [vmem:[%s3 + $0x260] sm:$0xf]
      %v1142 = vld [vmem:[%s3 + $0x264] sm:$0xf]
      %v1143 = vld [vmem:[%s3 + $0x268] sm:$0xf]
      %v1144 = vld [vmem:[%s3 + $0x26c] sm:$0xf]
      %v1145 = vld [vmem:[%s3 + $0x270] sm:$0xf]
      %v1146 = vld [vmem:[%s3 + $0x274] sm:$0xf]
      %v1147 = vld [vmem:[%s3 + $0x278] sm:$0xf]
      %v1148 = vld [vmem:[%s3 + $0x27c] sm:$0xf]
      %v1149 = vld [vmem:[%s3 + $0x280] sm:$0xf]
      %v1150 = vld [vmem:[%s3 + $0x284] sm:$0xf]
      %v1151 = vld [vmem:[%s3 + $0x288] sm:$0xf]
      %v1152 = vld [vmem:[%s3 + $0x28c] sm:$0xf]
      %v1153 = vld [vmem:[%s3 + $0x290] sm:$0xf]
      %v1154 = vld [vmem:[%s3 + $0x294] sm:$0xf]
      %v1155 = vld [vmem:[%s3 + $0x298] sm:$0xf]
      %v1156 = vld [vmem:[%s3 + $0x29c] sm:$0xf]
      %v1157 = vld [vmem:[%s3 + $0x2a0] sm:$0xf]
      %v1158 = vld [vmem:[%s3 + $0x2a4] sm:$0xf]
      %v1159 = vld [vmem:[%s3 + $0x2a8] sm:$0xf]
      %v1160 = vld [vmem:[%s3 + $0x2ac] sm:$0xf]
      %v1161 = vld [vmem:[%s3 + $0x2b0] sm:$0xf]
      %v1162 = vld [vmem:[%s3 + $0x2b4] sm:$0xf]
      %v1163 = vld [vmem:[%s3 + $0x2b8] sm:$0xf]
      %v1164 = vld [vmem:[%s3 + $0x2bc] sm:$0xf]
      %v1165 = vld [vmem:[%s3 + $0x2c0] sm:$0xf]
      %v1166 = vld [vmem:[%s3 + $0x2c4] sm:$0xf]
      %v1167 = vld [vmem:[%s3 + $0x2c8] sm:$0xf]
      %v1168 = vld [vmem:[%s3 + $0x2cc] sm:$0xf]
      %v1169 = vld [vmem:[%s3 + $0x2d0] sm:$0xf]
      %v1170 = vld [vmem:[%s3 + $0x2d4] sm:$0xf]
      %v1171 = vld [vmem:[%s3 + $0x2d8] sm:$0xf]
      %v1172 = vld [vmem:[%s3 + $0x2dc] sm:$0xf]
      %v1173 = vld [vmem:[%s3 + $0x2e0] sm:$0xf]
      %v1174 = vld [vmem:[%s3 + $0x2e4] sm:$0xf]
      %v1175 = vld [vmem:[%s3 + $0x2e8] sm:$0xf]
      %v1176 = vld [vmem:[%s3 + $0x2ec] sm:$0xf]
      %v1177 = vld [vmem:[%s3 + $0x2f0] sm:$0xf]
      %v1178 = vld [vmem:[%s3 + $0x2f4] sm:$0xf]
      %v1179 = vld [vmem:[%s3 + $0x2f8] sm:$0xf]
      %v1180 = vld [vmem:[%s3 + $0x2fc] sm:$0xf]
      %v1181 = vld [vmem:[%s3 + $0x300] sm:$0xf]
      %v1182 = vld [vmem:[%s3 + $0x304] sm:$0xf]
      %v1183 = vld [vmem:[%s3 + $0x308] sm:$0xf]
      %v1184 = vld [vmem:[%s3 + $0x30c] sm:$0xf]
      %v1185 = vld [vmem:[%s3 + $0x310] sm:$0xf]
      %v1186 = vld [vmem:[%s3 + $0x314] sm:$0xf]
      %v1187 = vld [vmem:[%s3 + $0x318] sm:$0xf]
      %v1188 = vld [vmem:[%s3 + $0x31c] sm:$0xf]
      %v1189 = vld [vmem:[%s3 + $0x320] sm:$0xf]
      %v1190 = vld [vmem:[%s3 + $0x324] sm:$0xf]
      %v1191 = vld [vmem:[%s3 + $0x328] sm:$0xf]
      %v1192 = vld [vmem:[%s3 + $0x32c] sm:$0xf]
      %v1193 = vld [vmem:[%s3 + $0x330] sm:$0xf]
      %v1194 = vld [vmem:[%s3 + $0x334] sm:$0xf]
      %v1195 = vld [vmem:[%s3 + $0x338] sm:$0xf]
      %v1196 = vld [vmem:[%s3 + $0x33c] sm:$0xf]
      %v1197 = vld [vmem:[%s3 + $0x340] sm:$0xf]
      %v1198 = vld [vmem:[%s3 + $0x344] sm:$0xf]
      %v1199 = vld [vmem:[%s3 + $0x348] sm:$0xf]
      %v1200 = vld [vmem:[%s3 + $0x34c] sm:$0xf]
      %v1201 = vld [vmem:[%s3 + $0x350] sm:$0xf]
      %v1202 = vld [vmem:[%s3 + $0x354] sm:$0xf]
      %v1203 = vld [vmem:[%s3 + $0x358] sm:$0xf]
      %v1204 = vld [vmem:[%s3 + $0x35c] sm:$0xf]
      %v1205 = vld [vmem:[%s3 + $0x360] sm:$0xf]
      %v1206 = vld [vmem:[%s3 + $0x364] sm:$0xf]
      %v1207 = vld [vmem:[%s3 + $0x368] sm:$0xf]
      %v1208 = vld [vmem:[%s3 + $0x36c] sm:$0xf]
      %v1209 = vld [vmem:[%s3 + $0x370] sm:$0xf]
      %v1210 = vld [vmem:[%s3 + $0x374] sm:$0xf]
      %v1211 = vld [vmem:[%s3 + $0x378] sm:$0xf]
      %v1212 = vld [vmem:[%s3 + $0x37c] sm:$0xf]
      %v1213 = vld [vmem:[%s3 + $0x380] sm:$0xf]
      %v1214 = vld [vmem:[%s3 + $0x384] sm:$0xf]
      %v1215 = vld [vmem:[%s3 + $0x388] sm:$0xf]
      %v1216 = vld [vmem:[%s3 + $0x38c] sm:$0xf]
      %v1217 = vld [vmem:[%s3 + $0x390] sm:$0xf]
      %v1218 = vld [vmem:[%s3 + $0x394] sm:$0xf]
      %v1219 = vld [vmem:[%s3 + $0x398] sm:$0xf]
      %v1220 = vld [vmem:[%s3 + $0x39c] sm:$0xf]
      %v1221 = vld [vmem:[%s3 + $0x3a0] sm:$0xf]
      %v1222 = vld [vmem:[%s3 + $0x3a4] sm:$0xf]
      %v1223 = vld [vmem:[%s3 + $0x3a8] sm:$0xf]
      %v1224 = vld [vmem:[%s3 + $0x3ac] sm:$0xf]
      %v1225 = vld [vmem:[%s3 + $0x3b0] sm:$0xf]
      %v1226 = vld [vmem:[%s3 + $0x3b4] sm:$0xf]
      %v1227 = vld [vmem:[%s3 + $0x3b8] sm:$0xf]
      %v1228 = vld [vmem:[%s3 + $0x3bc] sm:$0xf]
      %v1229 = vld [vmem:[%s3 + $0x3c0] sm:$0xf]
      %v1230 = vld [vmem:[%s3 + $0x3c4] sm:$0xf]
      %v1231 = vld [vmem:[%s3 + $0x3c8] sm:$0xf]
      %v1232 = vld [vmem:[%s3 + $0x3cc] sm:$0xf]
      %v1233 = vld [vmem:[%s3 + $0x3d0] sm:$0xf]
      %v1234 = vld [vmem:[%s3 + $0x3d4] sm:$0xf]
      %v1235 = vld [vmem:[%s3 + $0x3d8] sm:$0xf]
      %v1236 = vld [vmem:[%s3 + $0x3dc] sm:$0xf]
      %v1237 = vld [vmem:[%s3 + $0x3e0] sm:$0xf]
      %v1238 = vld [vmem:[%s3 + $0x3e4] sm:$0xf]
      %v1239 = vld [vmem:[%s3 + $0x3e8] sm:$0xf]
      %v1240 = vld [vmem:[%s3 + $0x3ec] sm:$0xf]
      %v1241 = vld [vmem:[%s3 + $0x3f0] sm:$0xf]
      %v1242 = vld [vmem:[%s3 + $0x3f4] sm:$0xf]
      %v1243 = vld [vmem:[%s3 + $0x3f8] sm:$0xf]
      %v1244 = vld [vmem:[%s3 + $0x3fc] sm:$0xf]
      %v1245 = vld [vmem:[%s4] sm:$0x1]
      %v1247 = vlaneseq
      %v1248 = vshrl.u32 %v1247, 7
      %v1249 = vsub.s32 0, %v1248
      %v1250 = vrot.slane %v1245, %v1249
      %v1508 = vunpack.c.l.b16 %v989
      %v1509 = vunpack.c.l.b16 %v990
      %v1510 = vunpack.c.l.b16 %v991
      %v1511 = vunpack.c.l.b16 %v992
      %v1512 = vunpack.c.l.b16 %v993
      %v1513 = vunpack.c.l.b16 %v994
      %v1514 = vunpack.c.l.b16 %v995
      %v1515 = vunpack.c.l.b16 %v996
      %v1516 = vunpack.c.l.b16 %v997
      %v1517 = vunpack.c.l.b16 %v998
      %v1518 = vunpack.c.l.b16 %v999
      %v1519 = vunpack.c.l.b16 %v1000
      %v1520 = vunpack.c.l.b16 %v1001
      %v1521 = vunpack.c.l.b16 %v1002
      %v1522 = vunpack.c.l.b16 %v1003
      %v1523 = vunpack.c.l.b16 %v1004
      %v1524 = vunpack.c.l.b16 %v1005
      %v1525 = vunpack.c.l.b16 %v1006
      %v1526 = vunpack.c.l.b16 %v1007
      %v1527 = vunpack.c.l.b16 %v1008
      %v1528 = vunpack.c.l.b16 %v1009
      %v1529 = vunpack.c.l.b16 %v1010
      %v1530 = vunpack.c.l.b16 %v1011
      %v1531 = vunpack.c.l.b16 %v1012
      %v1532 = vunpack.c.l.b16 %v1013
      %v1533 = vunpack.c.l.b16 %v1014
      %v1534 = vunpack.c.l.b16 %v1015
      %v1535 = vunpack.c.l.b16 %v1016
      %v1536 = vunpack.c.l.b16 %v1017
      %v1537 = vunpack.c.l.b16 %v1018
      %v1538 = vunpack.c.l.b16 %v1019
      %v1539 = vunpack.c.l.b16 %v1020
      %v1540 = vunpack.c.l.b16 %v1021
      %v1541 = vunpack.c.l.b16 %v1022
      %v1542 = vunpack.c.l.b16 %v1023
      %v1543 = vunpack.c.l.b16 %v1024
      %v1544 = vunpack.c.l.b16 %v1025
      %v1545 = vunpack.c.l.b16 %v1026
      %v1546 = vunpack.c.l.b16 %v1027
      %v1547 = vunpack.c.l.b16 %v1028
      %v1548 = vunpack.c.l.b16 %v1029
      %v1549 = vunpack.c.l.b16 %v1030
      %v1550 = vunpack.c.l.b16 %v1031
      %v1551 = vunpack.c.l.b16 %v1032
      %v1552 = vunpack.c.l.b16 %v1033
      %v1553 = vunpack.c.l.b16 %v1034
      %v1554 = vunpack.c.l.b16 %v1035
      %v1555 = vunpack.c.l.b16 %v1036
      %v1556 = vunpack.c.l.b16 %v1037
      %v1557 = vunpack.c.l.b16 %v1038
      %v1558 = vunpack.c.l.b16 %v1039
      %v1559 = vunpack.c.l.b16 %v1040
      %v1560 = vunpack.c.l.b16 %v1041
      %v1561 = vunpack.c.l.b16 %v1042
      %v1562 = vunpack.c.l.b16 %v1043
      %v1563 = vunpack.c.l.b16 %v1044
      %v1564 = vunpack.c.l.b16 %v1045
      %v1565 = vunpack.c.l.b16 %v1046
      %v1566 = vunpack.c.l.b16 %v1047
      %v1567 = vunpack.c.l.b16 %v1048
      %v1568 = vunpack.c.l.b16 %v1049
      %v1569 = vunpack.c.l.b16 %v1050
      %v1570 = vunpack.c.l.b16 %v1051
      %v1571 = vunpack.c.l.b16 %v1052
      %v1572 = vunpack.c.l.b16 %v1053
      %v1573 = vunpack.c.l.b16 %v1054
      %v1574 = vunpack.c.l.b16 %v1055
      %v1575 = vunpack.c.l.b16 %v1056
      %v1576 = vunpack.c.l.b16 %v1057
      %v1577 = vunpack.c.l.b16 %v1058
      %v1578 = vunpack.c.l.b16 %v1059
      %v1579 = vunpack.c.l.b16 %v1060
      %v1580 = vunpack.c.l.b16 %v1061
      %v1581 = vunpack.c.l.b16 %v1062
      %v1582 = vunpack.c.l.b16 %v1063
      %v1583 = vunpack.c.l.b16 %v1064
      %v1584 = vunpack.c.l.b16 %v1065
      %v1585 = vunpack.c.l.b16 %v1066
      %v1586 = vunpack.c.l.b16 %v1067
      %v1587 = vunpack.c.l.b16 %v1068
      %v1588 = vunpack.c.l.b16 %v1069
      %v1589 = vunpack.c.l.b16 %v1070
      %v1590 = vunpack.c.l.b16 %v1071
      %v1591 = vunpack.c.l.b16 %v1072
      %v1592 = vunpack.c.l.b16 %v1073
      %v1593 = vunpack.c.l.b16 %v1074
      %v1594 = vunpack.c.l.b16 %v1075
      %v1595 = vunpack.c.l.b16 %v1076
      %v1596 = vunpack.c.l.b16 %v1077
      %v1597 = vunpack.c.l.b16 %v1078
      %v1598 = vunpack.c.l.b16 %v1079
      %v1599 = vunpack.c.l.b16 %v1080
      %v1600 = vunpack.c.l.b16 %v1081
      %v1601 = vunpack.c.l.b16 %v1082
      %v1602 = vunpack.c.l.b16 %v1083
      %v1603 = vunpack.c.l.b16 %v1084
      %v1604 = vunpack.c.l.b16 %v1085
      %v1605 = vunpack.c.l.b16 %v1086
      %v1606 = vunpack.c.l.b16 %v1087
      %v1607 = vunpack.c.l.b16 %v1088
      %v1608 = vunpack.c.l.b16 %v1089
      %v1609 = vunpack.c.l.b16 %v1090
      %v1610 = vunpack.c.l.b16 %v1091
      %v1611 = vunpack.c.l.b16 %v1092
      %v1612 = vunpack.c.l.b16 %v1093
      %v1613 = vunpack.c.l.b16 %v1094
      %v1614 = vunpack.c.l.b16 %v1095
      %v1615 = vunpack.c.l.b16 %v1096
      %v1616 = vunpack.c.l.b16 %v1097
      %v1617 = vunpack.c.l.b16 %v1098
      %v1618 = vunpack.c.l.b16 %v1099
      %v1619 = vunpack.c.l.b16 %v1100
      %v1620 = vunpack.c.l.b16 %v1101
      %v1621 = vunpack.c.l.b16 %v1102
      %v1622 = vunpack.c.l.b16 %v1103
      %v1623 = vunpack.c.l.b16 %v1104
      %v1624 = vunpack.c.l.b16 %v1105
      %v1625 = vunpack.c.l.b16 %v1106
      %v1626 = vunpack.c.l.b16 %v1107
      %v1627 = vunpack.c.l.b16 %v1108
      %v1628 = vunpack.c.l.b16 %v1109
      %v1629 = vunpack.c.l.b16 %v1110
      %v1630 = vunpack.c.l.b16 %v1111
      %v1631 = vunpack.c.l.b16 %v1112
      %v1632 = vunpack.c.l.b16 %v1113
      %v1633 = vunpack.c.l.b16 %v1114
      %v1634 = vunpack.c.l.b16 %v1115
      %v1635 = vunpack.c.l.b16 %v1116
      %v1636 = vunpack.c.l.b16 %v1117
      %v1637 = vunpack.c.l.b16 %v1118
      %v1638 = vunpack.c.l.b16 %v1119
      %v1639 = vunpack.c.l.b16 %v1120
      %v1640 = vunpack.c.l.b16 %v1121
      %v1641 = vunpack.c.l.b16 %v1122
      %v1642 = vunpack.c.l.b16 %v1123
      %v1643 = vunpack.c.l.b16 %v1124
      %v1644 = vunpack.c.l.b16 %v1125
      %v1645 = vunpack.c.l.b16 %v1126
      %v1646 = vunpack.c.l.b16 %v1127
      %v1647 = vunpack.c.l.b16 %v1128
      %v1648 = vunpack.c.l.b16 %v1129
      %v1649 = vunpack.c.l.b16 %v1130
      %v1650 = vunpack.c.l.b16 %v1131
      %v1651 = vunpack.c.l.b16 %v1132
      %v1652 = vunpack.c.l.b16 %v1133
      %v1653 = vunpack.c.l.b16 %v1134
      %v1654 = vunpack.c.l.b16 %v1135
      %v1655 = vunpack.c.l.b16 %v1136
      %v1656 = vunpack.c.l.b16 %v1137
      %v1657 = vunpack.c.l.b16 %v1138
      %v1658 = vunpack.c.l.b16 %v1139
      %v1659 = vunpack.c.l.b16 %v1140
      %v1660 = vunpack.c.l.b16 %v1141
      %v1661 = vunpack.c.l.b16 %v1142
      %v1662 = vunpack.c.l.b16 %v1143
      %v1663 = vunpack.c.l.b16 %v1144
      %v1664 = vunpack.c.l.b16 %v1145
      %v1665 = vunpack.c.l.b16 %v1146
      %v1666 = vunpack.c.l.b16 %v1147
      %v1667 = vunpack.c.l.b16 %v1148
      %v1668 = vunpack.c.l.b16 %v1149
      %v1669 = vunpack.c.l.b16 %v1150
      %v1670 = vunpack.c.l.b16 %v1151
      %v1671 = vunpack.c.l.b16 %v1152
      %v1672 = vunpack.c.l.b16 %v1153
      %v1673 = vunpack.c.l.b16 %v1154
      %v1674 = vunpack.c.l.b16 %v1155
      %v1675 = vunpack.c.l.b16 %v1156
      %v1676 = vunpack.c.l.b16 %v1157
      %v1677 = vunpack.c.l.b16 %v1158
      %v1678 = vunpack.c.l.b16 %v1159
      %v1679 = vunpack.c.l.b16 %v1160
      %v1680 = vunpack.c.l.b16 %v1161
      %v1681 = vunpack.c.l.b16 %v1162
      %v1682 = vunpack.c.l.b16 %v1163
      %v1683 = vunpack.c.l.b16 %v1164
      %v1684 = vunpack.c.l.b16 %v1165
      %v1685 = vunpack.c.l.b16 %v1166
      %v1686 = vunpack.c.l.b16 %v1167
      %v1687 = vunpack.c.l.b16 %v1168
      %v1688 = vunpack.c.l.b16 %v1169
      %v1689 = vunpack.c.l.b16 %v1170
      %v1690 = vunpack.c.l.b16 %v1171
      %v1691 = vunpack.c.l.b16 %v1172
      %v1692 = vunpack.c.l.b16 %v1173
      %v1693 = vunpack.c.l.b16 %v1174
      %v1694 = vunpack.c.l.b16 %v1175
      %v1695 = vunpack.c.l.b16 %v1176
      %v1696 = vunpack.c.l.b16 %v1177
      %v1697 = vunpack.c.l.b16 %v1178
      %v1698 = vunpack.c.l.b16 %v1179
      %v1699 = vunpack.c.l.b16 %v1180
      %v1700 = vunpack.c.l.b16 %v1181
      %v1701 = vunpack.c.l.b16 %v1182
      %v1702 = vunpack.c.l.b16 %v1183
      %v1703 = vunpack.c.l.b16 %v1184
      %v1704 = vunpack.c.l.b16 %v1185
      %v1705 = vunpack.c.l.b16 %v1186
      %v1706 = vunpack.c.l.b16 %v1187
      %v1707 = vunpack.c.l.b16 %v1188
      %v1708 = vunpack.c.l.b16 %v1189
      %v1709 = vunpack.c.l.b16 %v1190
      %v1710 = vunpack.c.l.b16 %v1191
      %v1711 = vunpack.c.l.b16 %v1192
      %v1712 = vunpack.c.l.b16 %v1193
      %v1713 = vunpack.c.l.b16 %v1194
      %v1714 = vunpack.c.l.b16 %v1195
      %v1715 = vunpack.c.l.b16 %v1196
      %v1716 = vunpack.c.l.b16 %v1197
      %v1717 = vunpack.c.l.b16 %v1198
      %v1718 = vunpack.c.l.b16 %v1199
      %v1719 = vunpack.c.l.b16 %v1200
      %v1720 = vunpack.c.l.b16 %v1201
      %v1721 = vunpack.c.l.b16 %v1202
      %v1722 = vunpack.c.l.b16 %v1203
      %v1723 = vunpack.c.l.b16 %v1204
      %v1724 = vunpack.c.l.b16 %v1205
      %v1725 = vunpack.c.l.b16 %v1206
      %v1726 = vunpack.c.l.b16 %v1207
      %v1727 = vunpack.c.l.b16 %v1208
      %v1728 = vunpack.c.l.b16 %v1209
      %v1729 = vunpack.c.l.b16 %v1210
      %v1730 = vunpack.c.l.b16 %v1211
      %v1731 = vunpack.c.l.b16 %v1212
      %v1732 = vunpack.c.l.b16 %v1213
      %v1733 = vunpack.c.l.b16 %v1214
      %v1734 = vunpack.c.l.b16 %v1215
      %v1735 = vunpack.c.l.b16 %v1216
      %v1736 = vunpack.c.l.b16 %v1217
      %v1737 = vunpack.c.l.b16 %v1218
      %v1738 = vunpack.c.l.b16 %v1219
      %v1739 = vunpack.c.l.b16 %v1220
      %v1740 = vunpack.c.l.b16 %v1221
      %v1741 = vunpack.c.l.b16 %v1222
      %v1742 = vunpack.c.l.b16 %v1223
      %v1743 = vunpack.c.l.b16 %v1224
      %v1744 = vunpack.c.l.b16 %v1225
      %v1745 = vunpack.c.l.b16 %v1226
      %v1746 = vunpack.c.l.b16 %v1227
      %v1747 = vunpack.c.l.b16 %v1228
      %v1748 = vunpack.c.l.b16 %v1229
      %v1749 = vunpack.c.l.b16 %v1230
      %v1750 = vunpack.c.l.b16 %v1231
      %v1751 = vunpack.c.l.b16 %v1232
      %v1752 = vunpack.c.l.b16 %v1233
      %v1753 = vunpack.c.l.b16 %v1234
      %v1754 = vunpack.c.l.b16 %v1235
      %v1755 = vunpack.c.l.b16 %v1236
      %v1756 = vunpack.c.l.b16 %v1237
      %v1757 = vunpack.c.l.b16 %v1238
      %v1758 = vunpack.c.l.b16 %v1239
      %v1759 = vunpack.c.l.b16 %v1240
      %v1760 = vunpack.c.l.b16 %v1241
      %v1761 = vunpack.c.l.b16 %v1242
      %v1762 = vunpack.c.l.b16 %v1243
      %v1763 = vunpack.c.l.b16 %v1244
      %v1764 = vpack.c.b16 %v1509, %v1508
      %v1765 = vpack.c.b16 %v1511, %v1510
      %v1766 = vpack.c.b16 %v1513, %v1512
      %v1767 = vpack.c.b16 %v1515, %v1514
      %v1768 = vpack.c.b16 %v1517, %v1516
      %v1769 = vpack.c.b16 %v1519, %v1518
      %v1770 = vpack.c.b16 %v1521, %v1520
      %v1771 = vpack.c.b16 %v1523, %v1522
      %v1772 = vpack.c.b16 %v1525, %v1524
      %v1773 = vpack.c.b16 %v1527, %v1526
      %v1774 = vpack.c.b16 %v1529, %v1528
      %v1775 = vpack.c.b16 %v1531, %v1530
      %v1776 = vpack.c.b16 %v1533, %v1532
      %v1777 = vpack.c.b16 %v1535, %v1534
      %v1778 = vpack.c.b16 %v1537, %v1536
      %v1779 = vpack.c.b16 %v1539, %v1538
      %v1780 = vpack.c.b16 %v1541, %v1540
      %v1781 = vpack.c.b16 %v1543, %v1542
      %v1782 = vpack.c.b16 %v1545, %v1544
      %v1783 = vpack.c.b16 %v1547, %v1546
      %v1784 = vpack.c.b16 %v1549, %v1548
      %v1785 = vpack.c.b16 %v1551, %v1550
      %v1786 = vpack.c.b16 %v1553, %v1552
      %v1787 = vpack.c.b16 %v1555, %v1554
      %v1788 = vpack.c.b16 %v1557, %v1556
      %v1789 = vpack.c.b16 %v1559, %v1558
      %v1790 = vpack.c.b16 %v1561, %v1560
      %v1791 = vpack.c.b16 %v1563, %v1562
      %v1792 = vpack.c.b16 %v1565, %v1564
      %v1793 = vpack.c.b16 %v1567, %v1566
      %v1794 = vpack.c.b16 %v1569, %v1568
      %v1795 = vpack.c.b16 %v1571, %v1570
      %v1796 = vpack.c.b16 %v1573, %v1572
      %v1797 = vpack.c.b16 %v1575, %v1574
      %v1798 = vpack.c.b16 %v1577, %v1576
      %v1799 = vpack.c.b16 %v1579, %v1578
      %v1800 = vpack.c.b16 %v1581, %v1580
      %v1801 = vpack.c.b16 %v1583, %v1582
      %v1802 = vpack.c.b16 %v1585, %v1584
      %v1803 = vpack.c.b16 %v1587, %v1586
      %v1804 = vpack.c.b16 %v1589, %v1588
      %v1805 = vpack.c.b16 %v1591, %v1590
      %v1806 = vpack.c.b16 %v1593, %v1592
      %v1807 = vpack.c.b16 %v1595, %v1594
      %v1808 = vpack.c.b16 %v1597, %v1596
      %v1809 = vpack.c.b16 %v1599, %v1598
      %v1810 = vpack.c.b16 %v1601, %v1600
      %v1811 = vpack.c.b16 %v1603, %v1602
      %v1812 = vpack.c.b16 %v1605, %v1604
      %v1813 = vpack.c.b16 %v1607, %v1606
      %v1814 = vpack.c.b16 %v1609, %v1608
      %v1815 = vpack.c.b16 %v1611, %v1610
      %v1816 = vpack.c.b16 %v1613, %v1612
      %v1817 = vpack.c.b16 %v1615, %v1614
      %v1818 = vpack.c.b16 %v1617, %v1616
      %v1819 = vpack.c.b16 %v1619, %v1618
      %v1820 = vpack.c.b16 %v1621, %v1620
      %v1821 = vpack.c.b16 %v1623, %v1622
      %v1822 = vpack.c.b16 %v1625, %v1624
      %v1823 = vpack.c.b16 %v1627, %v1626
      %v1824 = vpack.c.b16 %v1629, %v1628
      %v1825 = vpack.c.b16 %v1631, %v1630
      %v1826 = vpack.c.b16 %v1633, %v1632
      %v1827 = vpack.c.b16 %v1635, %v1634
      %v1828 = vpack.c.b16 %v1637, %v1636
      %v1829 = vpack.c.b16 %v1639, %v1638
      %v1830 = vpack.c.b16 %v1641, %v1640
      %v1831 = vpack.c.b16 %v1643, %v1642
      %v1832 = vpack.c.b16 %v1645, %v1644
      %v1833 = vpack.c.b16 %v1647, %v1646
      %v1834 = vpack.c.b16 %v1649, %v1648
      %v1835 = vpack.c.b16 %v1651, %v1650
      %v1836 = vpack.c.b16 %v1653, %v1652
      %v1837 = vpack.c.b16 %v1655, %v1654
      %v1838 = vpack.c.b16 %v1657, %v1656
      %v1839 = vpack.c.b16 %v1659, %v1658
      %v1840 = vpack.c.b16 %v1661, %v1660
      %v1841 = vpack.c.b16 %v1663, %v1662
      %v1842 = vpack.c.b16 %v1665, %v1664
      %v1843 = vpack.c.b16 %v1667, %v1666
      %v1844 = vpack.c.b16 %v1669, %v1668
      %v1845 = vpack.c.b16 %v1671, %v1670
      %v1846 = vpack.c.b16 %v1673, %v1672
      %v1847 = vpack.c.b16 %v1675, %v1674
      %v1848 = vpack.c.b16 %v1677, %v1676
      %v1849 = vpack.c.b16 %v1679, %v1678
      %v1850 = vpack.c.b16 %v1681, %v1680
      %v1851 = vpack.c.b16 %v1683, %v1682
      %v1852 = vpack.c.b16 %v1685, %v1684
      %v1853 = vpack.c.b16 %v1687, %v1686
      %v1854 = vpack.c.b16 %v1689, %v1688
      %v1855 = vpack.c.b16 %v1691, %v1690
      %v1856 = vpack.c.b16 %v1693, %v1692
      %v1857 = vpack.c.b16 %v1695, %v1694
      %v1858 = vpack.c.b16 %v1697, %v1696
      %v1859 = vpack.c.b16 %v1699, %v1698
      %v1860 = vpack.c.b16 %v1701, %v1700
      %v1861 = vpack.c.b16 %v1703, %v1702
      %v1862 = vpack.c.b16 %v1705, %v1704
      %v1863 = vpack.c.b16 %v1707, %v1706
      %v1864 = vpack.c.b16 %v1709, %v1708
      %v1865 = vpack.c.b16 %v1711, %v1710
      %v1866 = vpack.c.b16 %v1713, %v1712
      %v1867 = vpack.c.b16 %v1715, %v1714
      %v1868 = vpack.c.b16 %v1717, %v1716
      %v1869 = vpack.c.b16 %v1719, %v1718
      %v1870 = vpack.c.b16 %v1721, %v1720
      %v1871 = vpack.c.b16 %v1723, %v1722
      %v1872 = vpack.c.b16 %v1725, %v1724
      %v1873 = vpack.c.b16 %v1727, %v1726
      %v1874 = vpack.c.b16 %v1729, %v1728
      %v1875 = vpack.c.b16 %v1731, %v1730
      %v1876 = vpack.c.b16 %v1733, %v1732
      %v1877 = vpack.c.b16 %v1735, %v1734
      %v1878 = vpack.c.b16 %v1737, %v1736
      %v1879 = vpack.c.b16 %v1739, %v1738
      %v1880 = vpack.c.b16 %v1741, %v1740
      %v1881 = vpack.c.b16 %v1743, %v1742
      %v1882 = vpack.c.b16 %v1745, %v1744
      %v1883 = vpack.c.b16 %v1747, %v1746
      %v1884 = vpack.c.b16 %v1749, %v1748
      %v1885 = vpack.c.b16 %v1751, %v1750
      %v1886 = vpack.c.b16 %v1753, %v1752
      %v1887 = vpack.c.b16 %v1755, %v1754
      %v1888 = vpack.c.b16 %v1757, %v1756
      %v1889 = vpack.c.b16 %v1759, %v1758
      %v1890 = vpack.c.b16 %v1761, %v1760
      %v1891 = vpack.c.b16 %v1763, %v1762
      %2020 = vmatprep.subr.bf16.mxu0 0
      %2021 = vmatpush1.bf16.msra.mxu0 %v1771
      %2022 = vmatprep.subr.bf16.mxu0 0
      %2023 = vmatpush1.bf16.msra.mxu0 %v1770
      %2024 = vmatprep.subr.bf16.mxu0 0
      %2025 = vmatpush1.bf16.msra.mxu0 %v1769
      %2026 = vmatprep.subr.bf16.mxu0 0
      %2027 = vmatpush1.bf16.msra.mxu0 %v1768
      %2028 = vmatprep.subr.bf16.mxu0 0
      %2029 = vmatpush1.bf16.msra.mxu0 %v1767
      %2030 = vmatprep.subr.bf16.mxu0 0
      %2031 = vmatpush1.bf16.msra.mxu0 %v1766
      %2032 = vmatprep.subr.bf16.mxu0 0
      %2033 = vmatpush1.bf16.msra.mxu0 %v1765
      %2034 = vmatprep.subr.bf16.mxu0 0
      %2035 = vmatpush1.bf16.msra.mxu0 %v1764
      %2036 = vmatprep.subr.bf16.mxu0 0
      %2037 = vmatpush2.bf16.msra.mxu0 %v1779
      %2038 = vmatprep.subr.bf16.mxu0 0
      %2039 = vmatpush2.bf16.msra.mxu0 %v1778
      %2040 = vmatprep.subr.bf16.mxu0 0
      %2041 = vmatpush2.bf16.msra.mxu0 %v1777
      %2042 = vmatprep.subr.bf16.mxu0 0
      %2043 = vmatpush2.bf16.msra.mxu0 %v1776
      %2044 = vmatprep.subr.bf16.mxu0 0
      %2045 = vmatpush2.bf16.msra.mxu0 %v1775
      %2046 = vmatprep.subr.bf16.mxu0 0
      %2047 = vmatpush2.bf16.msra.mxu0 %v1774
      %2048 = vmatprep.subr.bf16.mxu0 0
      %2049 = vmatpush2.bf16.msra.mxu0 %v1773
      %2050 = vmatprep.subr.bf16.mxu0 0
      %2051 = vmatpush2.bf16.msra.mxu0 %v1772
      %2052 = vmatprep.mubr.bf16.mxu0 %v974
      %2053 = vmatmul.mubr.bf16.gmra.mxu0 %v973
      %v2054 = vpop.f32.mrf.mxu0
      %v2055 = vadd.f32 %v1250, %v2054
      %v2056 = vpop.f32.mrf.mxu0
      %v2057 = vpop.f32.mrf.mxu0
      %v2058 = vpop.f32.mrf.mxu0
      %2059 = vdwg.mxu0
      %2060 = vmatprep.subr.bf16.mxu0 0
      %2061 = vmatpush1.bf16.msra.mxu0 %v1787
      %2062 = vmatprep.subr.bf16.mxu0 0
      %2063 = vmatpush1.bf16.msra.mxu0 %v1786
      %2064 = vmatprep.subr.bf16.mxu0 0
      %2065 = vmatpush1.bf16.msra.mxu0 %v1785
      %2066 = vmatprep.subr.bf16.mxu0 0
      %2067 = vmatpush1.bf16.msra.mxu0 %v1784
      %2068 = vmatprep.subr.bf16.mxu0 0
      %2069 = vmatpush1.bf16.msra.mxu0 %v1783
      %2070 = vmatprep.subr.bf16.mxu0 0
      %2071 = vmatpush1.bf16.msra.mxu0 %v1782
      %2072 = vmatprep.subr.bf16.mxu0 0
      %2073 = vmatpush1.bf16.msra.mxu0 %v1781
      %2074 = vmatprep.subr.bf16.mxu0 0
      %2075 = vmatpush1.bf16.msra.mxu0 %v1780
      %2076 = vmatprep.subr.bf16.mxu0 0
      %2077 = vmatpush2.bf16.msra.mxu0 %v1795
      %2078 = vmatprep.subr.bf16.mxu0 0
      %2079 = vmatpush2.bf16.msra.mxu0 %v1794
      %2080 = vmatprep.subr.bf16.mxu0 0
      %2081 = vmatpush2.bf16.msra.mxu0 %v1793
      %2082 = vmatprep.subr.bf16.mxu0 0
      %2083 = vmatpush2.bf16.msra.mxu0 %v1792
      %2084 = vmatprep.subr.bf16.mxu0 0
      %2085 = vmatpush2.bf16.msra.mxu0 %v1791
      %2086 = vmatprep.subr.bf16.mxu0 0
      %2087 = vmatpush2.bf16.msra.mxu0 %v1790
      %2088 = vmatprep.subr.bf16.mxu0 0
      %2089 = vmatpush2.bf16.msra.mxu0 %v1789
      %2090 = vmatprep.subr.bf16.mxu0 0
      %2091 = vmatpush2.bf16.msra.mxu0 %v1788
      %2092 = vmatprep.mubr.bf16.mxu0 %v976
      %2093 = vmatmul.mubr.bf16.gmra.mxu0 %v975
      %v2094 = vpop.f32.mrf.mxu0
      %v2095 = vadd.f32 %v2055, %v2094
      %v2096 = vpop.f32.mrf.mxu0
      %v2097 = vpop.f32.mrf.mxu0
      %v2098 = vpop.f32.mrf.mxu0
      %2099 = vdwg.mxu0
      %2100 = vmatprep.subr.bf16.mxu0 0
      %2101 = vmatpush1.bf16.msra.mxu0 %v1803
      %2102 = vmatprep.subr.bf16.mxu0 0
      %2103 = vmatpush1.bf16.msra.mxu0 %v1802
      %2104 = vmatprep.subr.bf16.mxu0 0
      %2105 = vmatpush1.bf16.msra.mxu0 %v1801
      %2106 = vmatprep.subr.bf16.mxu0 0
      %2107 = vmatpush1.bf16.msra.mxu0 %v1800
      %2108 = vmatprep.subr.bf16.mxu0 0
      %2109 = vmatpush1.bf16.msra.mxu0 %v1799
      %2110 = vmatprep.subr.bf16.mxu0 0
      %2111 = vmatpush1.bf16.msra.mxu0 %v1798
      %2112 = vmatprep.subr.bf16.mxu0 0
      %2113 = vmatpush1.bf16.msra.mxu0 %v1797
      %2114 = vmatprep.subr.bf16.mxu0 0
      %2115 = vmatpush1.bf16.msra.mxu0 %v1796
      %2116 = vmatprep.subr.bf16.mxu0 0
      %2117 = vmatpush2.bf16.msra.mxu0 %v1811
      %2118 = vmatprep.subr.bf16.mxu0 0
      %2119 = vmatpush2.bf16.msra.mxu0 %v1810
      %2120 = vmatprep.subr.bf16.mxu0 0
      %2121 = vmatpush2.bf16.msra.mxu0 %v1809
      %2122 = vmatprep.subr.bf16.mxu0 0
      %2123 = vmatpush2.bf16.msra.mxu0 %v1808
      %2124 = vmatprep.subr.bf16.mxu0 0
      %2125 = vmatpush2.bf16.msra.mxu0 %v1807
      %2126 = vmatprep.subr.bf16.mxu0 0
      %2127 = vmatpush2.bf16.msra.mxu0 %v1806
      %2128 = vmatprep.subr.bf16.mxu0 0
      %2129 = vmatpush2.bf16.msra.mxu0 %v1805
      %2130 = vmatprep.subr.bf16.mxu0 0
      %2131 = vmatpush2.bf16.msra.mxu0 %v1804
      %2132 = vmatprep.mubr.bf16.mxu0 %v978
      %2133 = vmatmul.mubr.bf16.gmra.mxu0 %v977
      %v2134 = vpop.f32.mrf.mxu0
      %v2135 = vadd.f32 %v2095, %v2134
      %v2136 = vpop.f32.mrf.mxu0
      %v2137 = vpop.f32.mrf.mxu0
      %v2138 = vpop.f32.mrf.mxu0
      %2139 = vdwg.mxu0
      %2140 = vmatprep.subr.bf16.mxu0 0
      %2141 = vmatpush1.bf16.msra.mxu0 %v1819
      %2142 = vmatprep.subr.bf16.mxu0 0
      %2143 = vmatpush1.bf16.msra.mxu0 %v1818
      %2144 = vmatprep.subr.bf16.mxu0 0
      %2145 = vmatpush1.bf16.msra.mxu0 %v1817
      %2146 = vmatprep.subr.bf16.mxu0 0
      %2147 = vmatpush1.bf16.msra.mxu0 %v1816
      %2148 = vmatprep.subr.bf16.mxu0 0
      %2149 = vmatpush1.bf16.msra.mxu0 %v1815
      %2150 = vmatprep.subr.bf16.mxu0 0
      %2151 = vmatpush1.bf16.msra.mxu0 %v1814
      %2152 = vmatprep.subr.bf16.mxu0 0
      %2153 = vmatpush1.bf16.msra.mxu0 %v1813
      %2154 = vmatprep.subr.bf16.mxu0 0
      %2155 = vmatpush1.bf16.msra.mxu0 %v1812
      %2156 = vmatprep.subr.bf16.mxu0 0
      %2157 = vmatpush2.bf16.msra.mxu0 %v1827
      %2158 = vmatprep.subr.bf16.mxu0 0
      %2159 = vmatpush2.bf16.msra.mxu0 %v1826
      %2160 = vmatprep.subr.bf16.mxu0 0
      %2161 = vmatpush2.bf16.msra.mxu0 %v1825
      %2162 = vmatprep.subr.bf16.mxu0 0
      %2163 = vmatpush2.bf16.msra.mxu0 %v1824
      %2164 = vmatprep.subr.bf16.mxu0 0
      %2165 = vmatpush2.bf16.msra.mxu0 %v1823
      %2166 = vmatprep.subr.bf16.mxu0 0
      %2167 = vmatpush2.bf16.msra.mxu0 %v1822
      %2168 = vmatprep.subr.bf16.mxu0 0
      %2169 = vmatpush2.bf16.msra.mxu0 %v1821
      %2170 = vmatprep.subr.bf16.mxu0 0
      %2171 = vmatpush2.bf16.msra.mxu0 %v1820
      %2172 = vmatprep.mubr.bf16.mxu0 %v980
      %2173 = vmatmul.mubr.bf16.gmra.mxu0 %v979
      %v2174 = vpop.f32.mrf.mxu0
      %v2175 = vadd.f32 %v2135, %v2174
      %v2176 = vpop.f32.mrf.mxu0
      %v2177 = vpop.f32.mrf.mxu0
      %v2178 = vpop.f32.mrf.mxu0
      %2179 = vdwg.mxu0
      %2180 = vmatprep.subr.bf16.mxu0 0
      %2181 = vmatpush1.bf16.msra.mxu0 %v1835
      %2182 = vmatprep.subr.bf16.mxu0 0
      %2183 = vmatpush1.bf16.msra.mxu0 %v1834
      %2184 = vmatprep.subr.bf16.mxu0 0
      %2185 = vmatpush1.bf16.msra.mxu0 %v1833
      %2186 = vmatprep.subr.bf16.mxu0 0
      %2187 = vmatpush1.bf16.msra.mxu0 %v1832
      %2188 = vmatprep.subr.bf16.mxu0 0
      %2189 = vmatpush1.bf16.msra.mxu0 %v1831
      %2190 = vmatprep.subr.bf16.mxu0 0
      %2191 = vmatpush1.bf16.msra.mxu0 %v1830
      %2192 = vmatprep.subr.bf16.mxu0 0
      %2193 = vmatpush1.bf16.msra.mxu0 %v1829
      %2194 = vmatprep.subr.bf16.mxu0 0
      %2195 = vmatpush1.bf16.msra.mxu0 %v1828
      %2196 = vmatprep.subr.bf16.mxu0 0
      %2197 = vmatpush2.bf16.msra.mxu0 %v1843
      %2198 = vmatprep.subr.bf16.mxu0 0
      %2199 = vmatpush2.bf16.msra.mxu0 %v1842
      %2200 = vmatprep.subr.bf16.mxu0 0
      %2201 = vmatpush2.bf16.msra.mxu0 %v1841
      %2202 = vmatprep.subr.bf16.mxu0 0
      %2203 = vmatpush2.bf16.msra.mxu0 %v1840
      %2204 = vmatprep.subr.bf16.mxu0 0
      %2205 = vmatpush2.bf16.msra.mxu0 %v1839
      %2206 = vmatprep.subr.bf16.mxu0 0
      %2207 = vmatpush2.bf16.msra.mxu0 %v1838
      %2208 = vmatprep.subr.bf16.mxu0 0
      %2209 = vmatpush2.bf16.msra.mxu0 %v1837
      %2210 = vmatprep.subr.bf16.mxu0 0
      %2211 = vmatpush2.bf16.msra.mxu0 %v1836
      %2212 = vmatprep.mubr.bf16.mxu0 %v982
      %2213 = vmatmul.mubr.bf16.gmra.mxu0 %v981
      %v2214 = vpop.f32.mrf.mxu0
      %v2215 = vadd.f32 %v2175, %v2214
      %v2216 = vpop.f32.mrf.mxu0
      %v2217 = vpop.f32.mrf.mxu0
      %v2218 = vpop.f32.mrf.mxu0
      %2219 = vdwg.mxu0
      %2220 = vmatprep.subr.bf16.mxu0 0
      %2221 = vmatpush1.bf16.msra.mxu0 %v1851
      %2222 = vmatprep.subr.bf16.mxu0 0
      %2223 = vmatpush1.bf16.msra.mxu0 %v1850
      %2224 = vmatprep.subr.bf16.mxu0 0
      %2225 = vmatpush1.bf16.msra.mxu0 %v1849
      %2226 = vmatprep.subr.bf16.mxu0 0
      %2227 = vmatpush1.bf16.msra.mxu0 %v1848
      %2228 = vmatprep.subr.bf16.mxu0 0
      %2229 = vmatpush1.bf16.msra.mxu0 %v1847
      %2230 = vmatprep.subr.bf16.mxu0 0
      %2231 = vmatpush1.bf16.msra.mxu0 %v1846
      %2232 = vmatprep.subr.bf16.mxu0 0
      %2233 = vmatpush1.bf16.msra.mxu0 %v1845
      %2234 = vmatprep.subr.bf16.mxu0 0
      %2235 = vmatpush1.bf16.msra.mxu0 %v1844
      %2236 = vmatprep.subr.bf16.mxu0 0
      %2237 = vmatpush2.bf16.msra.mxu0 %v1859
      %2238 = vmatprep.subr.bf16.mxu0 0
      %2239 = vmatpush2.bf16.msra.mxu0 %v1858
      %2240 = vmatprep.subr.bf16.mxu0 0
      %2241 = vmatpush2.bf16.msra.mxu0 %v1857
      %2242 = vmatprep.subr.bf16.mxu0 0
      %2243 = vmatpush2.bf16.msra.mxu0 %v1856
      %2244 = vmatprep.subr.bf16.mxu0 0
      %2245 = vmatpush2.bf16.msra.mxu0 %v1855
      %2246 = vmatprep.subr.bf16.mxu0 0
      %2247 = vmatpush2.bf16.msra.mxu0 %v1854
      %2248 = vmatprep.subr.bf16.mxu0 0
      %2249 = vmatpush2.bf16.msra.mxu0 %v1853
      %2250 = vmatprep.subr.bf16.mxu0 0
      %2251 = vmatpush2.bf16.msra.mxu0 %v1852
      %2252 = vmatprep.mubr.bf16.mxu0 %v984
      %2253 = vmatmul.mubr.bf16.gmra.mxu0 %v983
      %v2254 = vpop.f32.mrf.mxu0
      %v2255 = vadd.f32 %v2215, %v2254
      %v2256 = vpop.f32.mrf.mxu0
      %v2257 = vpop.f32.mrf.mxu0
      %v2258 = vpop.f32.mrf.mxu0
      %2259 = vdwg.mxu0
      %2260 = vmatprep.subr.bf16.mxu0 0
      %2261 = vmatpush1.bf16.msra.mxu0 %v1867
      %2262 = vmatprep.subr.bf16.mxu0 0
      %2263 = vmatpush1.bf16.msra.mxu0 %v1866
      %2264 = vmatprep.subr.bf16.mxu0 0
      %2265 = vmatpush1.bf16.msra.mxu0 %v1865
      %2266 = vmatprep.subr.bf16.mxu0 0
      %2267 = vmatpush1.bf16.msra.mxu0 %v1864
      %2268 = vmatprep.subr.bf16.mxu0 0
      %2269 = vmatpush1.bf16.msra.mxu0 %v1863
      %2270 = vmatprep.subr.bf16.mxu0 0
      %2271 = vmatpush1.bf16.msra.mxu0 %v1862
      %2272 = vmatprep.subr.bf16.mxu0 0
      %2273 = vmatpush1.bf16.msra.mxu0 %v1861
      %2274 = vmatprep.subr.bf16.mxu0 0
      %2275 = vmatpush1.bf16.msra.mxu0 %v1860
      %2276 = vmatprep.subr.bf16.mxu0 0
      %2277 = vmatpush2.bf16.msra.mxu0 %v1875
      %2278 = vmatprep.subr.bf16.mxu0 0
      %2279 = vmatpush2.bf16.msra.mxu0 %v1874
      %2280 = vmatprep.subr.bf16.mxu0 0
      %2281 = vmatpush2.bf16.msra.mxu0 %v1873
      %2282 = vmatprep.subr.bf16.mxu0 0
      %2283 = vmatpush2.bf16.msra.mxu0 %v1872
      %2284 = vmatprep.subr.bf16.mxu0 0
      %2285 = vmatpush2.bf16.msra.mxu0 %v1871
      %2286 = vmatprep.subr.bf16.mxu0 0
      %2287 = vmatpush2.bf16.msra.mxu0 %v1870
      %2288 = vmatprep.subr.bf16.mxu0 0
      %2289 = vmatpush2.bf16.msra.mxu0 %v1869
      %2290 = vmatprep.subr.bf16.mxu0 0
      %2291 = vmatpush2.bf16.msra.mxu0 %v1868
      %2292 = vmatprep.mubr.bf16.mxu0 %v986
      %2293 = vmatmul.mubr.bf16.gmra.mxu0 %v985
      %v2294 = vpop.f32.mrf.mxu0
      %v2295 = vadd.f32 %v2255, %v2294
      %v2296 = vpop.f32.mrf.mxu0
      %v2297 = vpop.f32.mrf.mxu0
      %v2298 = vpop.f32.mrf.mxu0
      %2299 = vdwg.mxu0
      %2300 = vmatprep.subr.bf16.mxu0 0
      %2301 = vmatpush1.bf16.msra.mxu0 %v1883
      %2302 = vmatprep.subr.bf16.mxu0 0
      %2303 = vmatpush1.bf16.msra.mxu0 %v1882
      %2304 = vmatprep.subr.bf16.mxu0 0
      %2305 = vmatpush1.bf16.msra.mxu0 %v1881
      %2306 = vmatprep.subr.bf16.mxu0 0
      %2307 = vmatpush1.bf16.msra.mxu0 %v1880
      %2308 = vmatprep.subr.bf16.mxu0 0
      %2309 = vmatpush1.bf16.msra.mxu0 %v1879
      %2310 = vmatprep.subr.bf16.mxu0 0
      %2311 = vmatpush1.bf16.msra.mxu0 %v1878
      %2312 = vmatprep.subr.bf16.mxu0 0
      %2313 = vmatpush1.bf16.msra.mxu0 %v1877
      %2314 = vmatprep.subr.bf16.mxu0 0
      %2315 = vmatpush1.bf16.msra.mxu0 %v1876
      %2316 = vmatprep.subr.bf16.mxu0 0
      %2317 = vmatpush2.bf16.msra.mxu0 %v1891
      %2318 = vmatprep.subr.bf16.mxu0 0
      %2319 = vmatpush2.bf16.msra.mxu0 %v1890
      %2320 = vmatprep.subr.bf16.mxu0 0
      %2321 = vmatpush2.bf16.msra.mxu0 %v1889
      %2322 = vmatprep.subr.bf16.mxu0 0
      %2323 = vmatpush2.bf16.msra.mxu0 %v1888
      %2324 = vmatprep.subr.bf16.mxu0 0
      %2325 = vmatpush2.bf16.msra.mxu0 %v1887
      %2326 = vmatprep.subr.bf16.mxu0 0
      %2327 = vmatpush2.bf16.msra.mxu0 %v1886
      %2328 = vmatprep.subr.bf16.mxu0 0
      %2329 = vmatpush2.bf16.msra.mxu0 %v1885
      %2330 = vmatprep.subr.bf16.mxu0 0
      %2331 = vmatpush2.bf16.msra.mxu0 %v1884
      %2332 = vmatprep.mubr.bf16.mxu0 %v988
      %2333 = vmatmul.mubr.bf16.gmra.mxu0 %v987
      %v2334 = vpop.f32.mrf.mxu0
      %v2335 = vadd.f32 %v2295, %v2334
      %v2336 = vpop.f32.mrf.mxu0
      %v2337 = vpop.f32.mrf.mxu0
      %v2338 = vpop.f32.mrf.mxu0
      %2339 = vdwg.mxu0
      %v2340 = vmax.f32 %v2335, 0.0
      %v2341 = vpack.c.bf16 %v2340, %v2340
      %v2342 = vld [vmem:[%s5] sm:$0xf]
      %v2343 = vld [vmem:[%s5 + $0x4] sm:$0xf]
      %v2344 = vld [vmem:[%s5 + $0x8] sm:$0xf]
      %v2345 = vld [vmem:[%s5 + $0xc] sm:$0xf]
      %v2346 = vld [vmem:[%s5 + $0x10] sm:$0xf]
      %v2347 = vld [vmem:[%s5 + $0x14] sm:$0xf]
      %v2348 = vld [vmem:[%s5 + $0x18] sm:$0xf]
      %v2349 = vld [vmem:[%s5 + $0x1c] sm:$0xf]
      %v2350 = vld [vmem:[%s5 + $0x20] sm:$0xf]
      %v2351 = vld [vmem:[%s5 + $0x24] sm:$0xf]
      %v2352 = vld [vmem:[%s5 + $0x28] sm:$0xf]
      %v2353 = vld [vmem:[%s5 + $0x2c] sm:$0xf]
      %v2354 = vld [vmem:[%s5 + $0x30] sm:$0xf]
      %v2355 = vld [vmem:[%s5 + $0x34] sm:$0xf]
      %v2356 = vld [vmem:[%s5 + $0x38] sm:$0xf]
      %v2357 = vld [vmem:[%s5 + $0x3c] sm:$0xf]
      %v2358 = vld [vmem:[%s6] sm:$0x1]
      %v2360 = vlaneseq
      %v2361 = vshrl.u32 %v2360, 7
      %v2362 = vsub.s32 0, %v2361
      %v2363 = vrot.slane %v2358, %v2362
      %v2381 = vunpack.c.l.b16 %v2342
      %v2382 = vunpack.c.l.b16 %v2343
      %v2383 = vunpack.c.l.b16 %v2344
      %v2384 = vunpack.c.l.b16 %v2345
      %v2385 = vunpack.c.l.b16 %v2346
      %v2386 = vunpack.c.l.b16 %v2347
      %v2387 = vunpack.c.l.b16 %v2348
      %v2388 = vunpack.c.l.b16 %v2349
      %v2389 = vunpack.c.l.b16 %v2350
      %v2390 = vunpack.c.l.b16 %v2351
      %v2391 = vunpack.c.l.b16 %v2352
      %v2392 = vunpack.c.l.b16 %v2353
      %v2393 = vunpack.c.l.b16 %v2354
      %v2394 = vunpack.c.l.b16 %v2355
      %v2395 = vunpack.c.l.b16 %v2356
      %v2396 = vunpack.c.l.b16 %v2357
      %v2397 = vpack.c.b16 %v2382, %v2381
      %v2398 = vpack.c.b16 %v2384, %v2383
      %v2399 = vpack.c.b16 %v2386, %v2385
      %v2400 = vpack.c.b16 %v2388, %v2387
      %v2401 = vpack.c.b16 %v2390, %v2389
      %v2402 = vpack.c.b16 %v2392, %v2391
      %v2403 = vpack.c.b16 %v2394, %v2393
      %v2404 = vpack.c.b16 %v2396, %v2395
      %2413 = vmatprep.subr.bf16.mxu0 0
      %2414 = vmatpush1.bf16.msra.mxu0 %v2404
      %2415 = vmatprep.subr.bf16.mxu0 0
      %2416 = vmatpush1.bf16.msra.mxu0 %v2403
      %2417 = vmatprep.subr.bf16.mxu0 0
      %2418 = vmatpush1.bf16.msra.mxu0 %v2402
      %2419 = vmatprep.subr.bf16.mxu0 0
      %2420 = vmatpush1.bf16.msra.mxu0 %v2401
      %2421 = vmatprep.subr.bf16.mxu0 0
      %2422 = vmatpush1.bf16.msra.mxu0 %v2400
      %2423 = vmatprep.subr.bf16.mxu0 0
      %2424 = vmatpush1.bf16.msra.mxu0 %v2399
      %2425 = vmatprep.subr.bf16.mxu0 0
      %2426 = vmatpush1.bf16.msra.mxu0 %v2398
      %2427 = vmatprep.subr.bf16.mxu0 0
      %2428 = vmatpush1.bf16.msra.mxu0 %v2397
      %2429 = vmatprep.subr.bf16.mxu0 0
      %2430 = vmatpush2.bf16.msra.mxu0 0
      %2431 = vmatprep.subr.bf16.mxu0 0
      %2432 = vmatpush2.bf16.msra.mxu0 0
      %2433 = vmatprep.subr.bf16.mxu0 0
      %2434 = vmatpush2.bf16.msra.mxu0 0
      %2435 = vmatprep.subr.bf16.mxu0 0
      %2436 = vmatpush2.bf16.msra.mxu0 0
      %2437 = vmatprep.subr.bf16.mxu0 0
      %2438 = vmatpush2.bf16.msra.mxu0 0
      %2439 = vmatprep.subr.bf16.mxu0 0
      %2440 = vmatpush2.bf16.msra.mxu0 0
      %2441 = vmatprep.subr.bf16.mxu0 0
      %2442 = vmatpush2.bf16.msra.mxu0 0
      %2443 = vmatprep.subr.bf16.mxu0 0
      %2444 = vmatpush2.bf16.msra.mxu0 0
      %2445 = vmatprep.mubr.bf16.mxu0 0
      %2446 = vmatmul.mubr.bf16.gmra.mxu0 %v2341
      %v2447 = vpop.f32.mrf.mxu0
      %v2448 = vadd.f32 %v2363, %v2447
      %v2449 = vpop.f32.mrf.mxu0
      %v2450 = vpop.f32.mrf.mxu0
      %v2451 = vpop.f32.mrf.mxu0
      %2452 = vdwg.mxu0
      %v2453 = vlaneseq
      %v2454 = vand.u32 %v2453, 127
      %vm2455 = vcmp.lt.s32.totalorder %v2454, 10
      %vm2456 = vcmp.eq.s32.totalorder %v2454, 10
      %v2457 = vsel %vm2455, %v2448, -inf
      %2458 = vmax.xlane.f32.xlu0 %v2457
      %v2459 = vpop.xlane.xlu0 %2458
      %v2460 = vsub.f32 %v2457, %v2459
      %v2461 = vmul.f32 %v2460, 1.442695
      %v2462 = vpow.pop %v2461
      %2463 = vadd.xlane.f32.xlu0 %v2462
      %v2464 = vpop.xlane.xlu0 %2463
      %v2465 = vlog2.pop %v2464
      %v2466 = vmul.f32 %v2465, 0.6931472
      %v2467 = vadd.f32 %v2459, %v2466
      %v2468 = vsub.f32 %v2448, %v2467
      %v2469 = vmul.f32 %v2448, 0.5
      %v2470 = vtanh.pop %v2469
      %v2471 = vadd.f32 %v2470, 1.0
      %v2472 = vmul.f32 %v2471, 0.5
      %2474 = vset.pattern.permute.xlu0 10
      %2475 = vperm.xlu0 %2474, %v2472
      %v2476 = vpop.permute.xlu0 %2475
      %v2478 = vsel %vm2456, %v2476, 0.0
      %v2479 = vsel %vm2455, %v2468, %v2478
      %2480 = vst [vmem:[%s278] sm:$0xff] %v2479
      %p2481 = scmp.lt.s32.totalorder %s18, 1
      %s2482 = scalar_select %p2481, %s18, 1
      %s2483 = smul.addr %s2482, 8
      %s2484 = scalar_lea.vmem %s7, %s2483
      // Predicated region
      $region49: #{dann_forward.1} parent=47 // pred_check
        %p2485 = pneg %p188
      $region50: #{dann_forward.1} parent=47 // pred_check_branch
        %2487 = sbr.rel (%p2485) target = $region52
      $region51: #{dann_forward.1} parent=47 // pred_region
        _
      $region52: #{dann_forward.1} parent=47 // pred_fallthru
        _
    $region48: #{dann_forward.1} parent=5 // pred_fallthru
      _
    %p2488 = scmp.le.s32.totalorder 2, %s13
    // Predicated region
    $region53: #{dann_forward.1} parent=5 // pred_check
      %p2489 = pneg %p2488
    $region54: #{dann_forward.1} parent=5 // pred_check_branch
      %2491 = sbr.rel (%p2489) target = $region56
    $region55: #{dann_forward.1} parent=5 // pred_region
      %s2492 = ssub.s32 %s13, 2
      // Predicated region
      $region57: #{dann_forward.1} parent=55 // pred_check
        %p2493 = pneg %p194
      $region58: #{dann_forward.1} parent=55 // pred_check_branch
        %2495 = sbr.rel (%p2493) target = $region60
      $region59: #{dann_forward.1} parent=55 // pred_region
        %p2496 = scmp.lt.s32.totalorder %s19, 1
        %s2497 = scalar_select %p2496, %s19, 1
        %s2498 = smul.addr %s2497, 8
        %s2499 = scalar_lea.vmem %s7, %s2498
      $region60: #{dann_forward.1} parent=55 // pred_fallthru
        _
    $region56: #{dann_forward.1} parent=5 // pred_fallthru
      _
  $region6: #{dann_forward.1} parent=0 // loop_footer
    %s17 = sadd.s32 1, %s13
  $region7: #{dann_forward.1} parent=0 // loop_footer_branch
    %12 = sbr.rel target = $region3
  $region8: #{dann_forward.1} parent=0 // loop_exit
    _

</llo_original>
